<compile_context>
chip_gen: v7x
topology: tpu7x:2x2x1
jax: 0.10.0
libtpu: 0.0.40
codegen_flags: <defaults>
</compile_context>

<pallas_src>
import functools
import math

import jax
import jax.numpy as jnp
from jax import lax
from jax.experimental import pallas as pl
from jax.experimental.pallas import tpu as pltpu


_TAPS = tuple((kh, kw) for kh in range(3) for kw in range(3))


# ----------------------------- Pallas kernel ------------------------------- #

def _conv_bn_act_kernel(*refs, mode, Ho, Wo, cin, relu, shortcut):
    """Fused 3x3 conv (+folded BN) (+shortcut) (+ReLU) for a block of B images.

    Refs (per grid step):
      x_ref : mode=="pad"    -> (B, Ho, Wo, Cin)        bf16 (unpadded; halo built in VMEM)
              mode=="phases" -> (B, 4, Ho+1, Wo+1, Cin) bf16 (stride-2 phase split, padded)
      xs_ref (proj only): (B, Ho, Wo, Cs) bf16 — 1x1-shortcut input, appended to the slab.
      w_ref : (K, Cout) bf16, K = 9*Cin (+ Cs for proj); BN scale folded in.
      b_ref : (1, Cout) f32 folded BN bias (proj: conv2-BN + shortcut-BN biases pre-merged).
      res_ref (add only): (B, Ho, Wo, Cout) bf16 identity residual.
      o_ref : (B, Ho, Wo, Cout).
    Scratch:
      mode=="pad":    xpad_ref (B, Ho+2, Wo+2, Cin) bf16 ; slab_ref (B, Ho, Wo, K) bf16
      mode=="phases": slab_ref (B, Ho, Wo, K) bf16
    """
    if shortcut == "proj":
        x_ref, xs_ref, w_ref, b_ref, o_ref, *scratch = refs
    elif shortcut == "add":
        x_ref, w_ref, b_ref, res_ref, o_ref, *scratch = refs
    else:
        x_ref, w_ref, b_ref, o_ref, *scratch = refs
    if mode == "pad":
        xpad_ref, slab_ref = scratch
    else:
        (slab_ref,) = scratch

    B = o_ref.shape[0]
    cout = o_ref.shape[-1]
    M = B * Ho * Wo
    k_tot = slab_ref.shape[-1]

    if mode == "pad":
        # Build the 1-pixel zero halo in VMEM: only the four border strips are
        # zeroed and the interior is stored exactly once (no double full-tile store).
        dt = xpad_ref.dtype
        zrow = jnp.zeros((B, 1, Wo + 2, cin), dt)
        zcol = jnp.zeros((B, Ho + 2, 1, cin), dt)
        xpad_ref[:, 0:1, :, :] = zrow
        xpad_ref[:, Ho + 1:Ho + 2, :, :] = zrow
        xpad_ref[:, :, 0:1, :] = zcol
        xpad_ref[:, :, Wo + 1:Wo + 2, :] = zcol
        xpad_ref[:, 1:Ho + 1, 1:Wo + 1, :] = x_ref[...]

    # im2col slab: 9 shifted unit-stride windows stacked along the K (lane) axis.
    for t, (kh, kw) in enumerate(_TAPS):
        if mode == "pad":
            win = xpad_ref[:, kh:kh + Ho, kw:kw + Wo, :]
        else:  # stride-2 phases: tap -> (phase index, static unit-stride window)
            s = 2 * (kh % 2) + (kw % 2)
            a0, b0 = kh // 2, kw // 2
            win = x_ref[:, s, a0:a0 + Ho, b0:b0 + Wo, :]
        slab_ref[:, :, :, t * cin:(t + 1) * cin] = win

    if shortcut == "proj":
        # 1x1 projection shortcut folded into the same matmul: its input occupies
        # the trailing K rows of the weight, so just append it to the slab.
        slab_ref[:, :, :, 9 * cin:] = xs_ref[...]

    # Single stacked-K matmul on the MXU: (M, K) @ (K, Cout), f32 accumulation.
    slab = slab_ref[...].reshape(M, k_tot)          # leading-dim merge: free
    acc = jnp.dot(slab, w_ref[...], preferred_element_type=jnp.float32)
    acc = acc + b_ref[...]                          # folded BN bias(es)

    if shortcut == "add":                           # identity residual, bf16 in, f32 acc
        acc = acc + res_ref[...].reshape(M, cout).astype(jnp.float32)
    if relu:
        acc = jnp.maximum(acc, 0.0)

    # Single aligned full-tile store.
    o_ref[...] = acc.reshape(B, Ho, Wo, cout).astype(o_ref.dtype)


# ------------------------------ kernel wrapper ------------------------------ #

def _vmem_limit_bytes():
    """Per-generation VMEM budget: ~48 MiB on v7x (64 MiB/TC), ~96 MiB on v5e/v6e."""
    try:
        cap = int(pltpu.get_tpu_info().vmem_capacity_bytes)
    except Exception:            # API drift / emulation — fall back to smallest (v7x)
        cap = 64 * 1024 * 1024
    return int(min((cap * 3) // 4, 100 * 1024 * 1024))


def _pick_batch_block(N, per_image_bytes, fixed_bytes, acc_bytes_per_image, vmem_limit):
    """Largest divisor-of-N batch block that fits the VMEM budget, keeps the
    per-step f32 accumulator small (no spill regime), and keeps >= 2 grid steps
    so v7x's two TensorCores both get work."""
    budget = int(vmem_limit * 0.6) - fixed_bytes
    acc_budget = 512 * 1024
    best = 1
    for B in range(1, N + 1):
        if N % B:
            continue
        if N >= 2 and N // B < 2:
            continue
        if B * per_image_bytes <= budget and B * acc_bytes_per_image <= acc_budget:
            best = B
    return best


def _conv_bn_act(x_in, w, bias, *, mode, Ho, Wo, cin, relu, shortcut="none",
                 xs=None, res=None, out_dtype=jnp.float32):
    N = x_in.shape[0]
    K, Cout = w.shape
    out_isize = jnp.dtype(out_dtype).itemsize

    # Per-image VMEM footprint: double-buffered ins/outs + im2col slab + accumulator.
    per_img = 2 * 2 * math.prod(x_in.shape[1:])          # x (bf16), double-buffered
    per_img += 2 * Ho * Wo * Cout * out_isize            # out, double-buffered
    per_img += Ho * Wo * K * 2                           # im2col slab scratch
    if mode == "pad":
        per_img += (Ho + 2) * (Wo + 2) * cin * 2         # padded-input scratch
    if xs is not None:
        per_img += 2 * Ho * Wo * xs.shape[-1] * 2
    if res is not None:
        per_img += 2 * Ho * Wo * Cout * 2
    acc_img = Ho * Wo * Cout * 4                         # f32 accumulator
    fixed = K * Cout * 2 + Cout * 4                      # weights + bias (resident)
    vmem_limit = _vmem_limit_bytes()
    B = _pick_batch_block(N, per_img + acc_img, fixed, acc_img, vmem_limit)
    # TODO(synk): for very large Ho*Wo*Cout add a spatial row-tile grid axis so the
    #             per-step accumulator stays small; not needed at CIFAR-10 sizes.

    if mode == "phases":
        x_spec = pl.BlockSpec((B,) + tuple(x_in.shape[1:]), lambda n: (n, 0, 0, 0, 0))
    else:
        x_spec = pl.BlockSpec((B, Ho, Wo, cin), lambda n: (n, 0, 0, 0))

    in_specs = [x_spec]
    args = [x_in]
    if shortcut == "proj":
        in_specs.append(pl.BlockSpec((B, Ho, Wo, xs.shape[-1]), lambda n: (n, 0, 0, 0)))
        args.append(xs)
    in_specs += [pl.BlockSpec((K, Cout), lambda n: (0, 0)),
                 pl.BlockSpec((1, Cout), lambda n: (0, 0))]
    args += [w, bias]
    if shortcut == "add":
        in_specs.append(pl.BlockSpec((B, Ho, Wo, Cout), lambda n: (n, 0, 0, 0)))
        args.append(res)

    scratch = [pltpu.VMEM((B, Ho, Wo, K), jnp.bfloat16)]
    if mode == "pad":
        scratch = [pltpu.VMEM((B, Ho + 2, Wo + 2, cin), jnp.bfloat16)] + scratch

    flops = 2 * N * Ho * Wo * K * Cout
    bytes_accessed = (N * Ho * Wo * Cout * out_isize
                      + sum(int(a.size) * a.dtype.itemsize for a in args))

    kernel = functools.partial(_conv_bn_act_kernel, mode=mode, Ho=Ho, Wo=Wo,
                               cin=cin, relu=relu, shortcut=shortcut)

    return pl.pallas_call(
        kernel,
        out_shape=jax.ShapeDtypeStruct((N, Ho, Wo, Cout), out_dtype),
        grid_spec=pltpu.PrefetchScalarGridSpec(
            num_scalar_prefetch=0,
            grid=(N // B,),                                # one grid step per image block
            in_specs=in_specs,
            out_specs=pl.BlockSpec((B, Ho, Wo, Cout), lambda n: (n, 0, 0, 0)),
            scratch_shapes=scratch,
        ),
        compiler_params=pltpu.CompilerParams(
            # Batch blocks are independent -> shard across v7x's two TensorCores.
            # TODO(synk): verify the split in compiled output; fall back to
            #             pltpu.CORE_PARALLEL / pl.core_map if "parallel" does not shard.
            dimension_semantics=("parallel",),
            vmem_limit_bytes=vmem_limit),
        cost_estimate=pl.CostEstimate(flops=int(flops), transcendentals=0,
                                      bytes_accessed=int(bytes_accessed)),
    )(*args)


# ------------------------------ JAX glue ----------------------------------- #

def _make_phases(x_bf16):
    """Pad (+1 halo) and space-to-depth split so every stride-2 tap becomes a
    unit-stride static window: (N, H, W, C) -> (N, 4, H/2+1, W/2+1, C)."""
    xp = jnp.pad(x_bf16, ((0, 0), (1, 1), (1, 1), (0, 0)))
    phases = [xp[:, p::2, q::2, :] for p in (0, 1) for q in (0, 1)]
    return jnp.stack(phases, axis=1)


def fold_bn(gamma, beta, mean, var, eps=1e-5):
    scale = gamma / jnp.sqrt(var + eps)
    bias = beta - mean * scale
    return scale, bias


def basic_block_forward(x_nchw, params, stride):
    """Forward pass equivalent to the PyTorch BasicBlock (inference-mode BN)."""
    assert stride in (1, 2)
    x = jnp.transpose(x_nchw, (0, 2, 3, 1)).astype(jnp.float32)   # NCHW -> NHWC
    N, H, W, Cin = x.shape
    planes = params["w1"].shape[-1]
    assert H % stride == 0 and W % stride == 0
    Ho, Wo = H // stride, W // stride

    # Fold BN scale into conv weights (f32 math), then cast matmul operands to bf16.
    s1, b1 = fold_bn(*params["bn1"])
    w1 = (params["w1"] * s1).reshape(9 * Cin, planes).astype(jnp.bfloat16)
    b1 = b1.reshape(1, planes).astype(jnp.float32)
    s2, b2 = fold_bn(*params["bn2"])
    w2 = (params["w2"] * s2).reshape(9 * planes, planes).astype(jnp.bfloat16)

    x_bf = x.astype(jnp.bfloat16)

    # conv1 (3x3, stride) + bn1 + relu — bf16 activation, stored once, unpadded.
    if stride == 1:
        h = _conv_bn_act(x_bf, w1, b1, mode="pad", Ho=Ho, Wo=Wo, cin=Cin,
                         relu=True, out_dtype=jnp.bfloat16)
    else:
        h = _conv_bn_act(_make_phases(x_bf), w1, b1, mode="phases", Ho=Ho, Wo=Wo,
                         cin=Cin, relu=True, out_dtype=jnp.bfloat16)

    # conv2 (3x3, stride 1) + bn2 + shortcut + relu, all fused in one kernel.
    if params["shortcut"] is not None:
        ws_raw, bn_s = params["shortcut"]
        ss, bs = fold_bn(*bn_s)
        ws = (ws_raw.reshape(Cin, planes) * ss).astype(jnp.bfloat16)
        w2p = jnp.concatenate([w2, ws], axis=0)              # (9*planes + Cin, planes)
        b_tot = (b2 + bs).reshape(1, planes).astype(jnp.float32)   # pre-merged biases
        xs = x_bf[:, ::stride, ::stride, :]                   # (N, Ho, Wo, Cin) bf16
        out = _conv_bn_act(h, w2p, b_tot, mode="pad", Ho=Ho, Wo=Wo, cin=planes,
                           relu=True, shortcut="proj", xs=xs, out_dtype=jnp.float32)
    else:
        b2v = b2.reshape(1, planes).astype(jnp.float32)
        out = _conv_bn_act(h, w2, b2v, mode="pad", Ho=Ho, Wo=Wo, cin=planes,
                           relu=True, shortcut="add", res=x_bf, out_dtype=jnp.float32)
    return jnp.transpose(out, (0, 3, 1, 2))                   # NHWC -> NCHW


# --------------------------- parameters / reference ------------------------ #

def init_params(key, in_planes, planes, stride):
    ks = jax.random.split(key, 6)

    def bn_params(k, c):
        k1, k2, k3, k4 = jax.random.split(k, 4)
        gamma = 1.0 + 0.1 * jax.random.normal(k1, (c,), jnp.float32)
        beta = 0.1 * jax.random.normal(k2, (c,), jnp.float32)
        mean = 0.1 * jax.random.normal(k3, (c,), jnp.float32)
        var = jax.random.uniform(k4, (c,), jnp.float32, 0.5, 1.5)
        return (gamma, beta, mean, var)

    params = {
        "w1": 0.1 * jax.random.normal(ks[0], (3, 3, in_planes, planes), jnp.float32),
        "w2": 0.1 * jax.random.normal(ks[1], (3, 3, planes, planes), jnp.float32),
        "bn1": bn_params(ks[2], planes),
        "bn2": bn_params(ks[3], planes),
    }
    if stride != 1 or in_planes != planes:
        params["shortcut"] = (
            0.1 * jax.random.normal(ks[4], (1, 1, in_planes, planes), jnp.float32),
            bn_params(ks[5], planes),
        )
    else:
        params["shortcut"] = None
    return params


def ref_forward(x_nchw, params, stride):
    """Pure-JAX f32 reference (lax.conv) for correctness checking."""
    x = jnp.transpose(x_nchw, (0, 2, 3, 1))
    dn = ("NHWC", "HWIO", "NHWC")
    prec = lax.Precision.HIGHEST
    s1, b1 = fold_bn(*params["bn1"])
    h = lax.conv_general_dilated(x, params["w1"], (stride, stride),
                                 ((1, 1), (1, 1)), dimension_numbers=dn,
                                 precision=prec)
    h = jnp.maximum(h * s1 + b1, 0.0)
    s2, b2 = fold_bn(*params["bn2"])
    o = lax.conv_general_dilated(h, params["w2"], (1, 1), ((1, 1), (1, 1)),
                                 dimension_numbers=dn, precision=prec)
    o = o * s2 + b2
    if params["shortcut"] is not None:
        ws, bn_s = params["shortcut"]
        ss, bs = fold_bn(*bn_s)
        sc = lax.conv_general_dilated(x, ws, (stride, stride), ((0, 0), (0, 0)),
                                      dimension_numbers=dn, precision=prec)
        sc = sc * ss + bs
    else:
        sc = x
    out = jnp.maximum(o + sc, 0.0)
    return jnp.transpose(out, (0, 3, 1, 2))


# --------------------------------- main ------------------------------------ #

if __name__ == "__main__":
    key = jax.random.PRNGKey(0)
    kx1, kp1, kx2, kp2 = jax.random.split(key, 4)

    fwd = jax.jit(basic_block_forward, static_argnums=(2,))

    # Config 1: projection shortcut (stride=2, channel change 4 -> 8).
    N, Cin, H, W, planes, stride = 2, 4, 16, 16, 8, 2
    x1 = jax.random.normal(kx1, (N, Cin, H, W), jnp.float32)
    params1 = init_params(kp1, Cin, planes, stride)
    out1 = jax.block_until_ready(fwd(x1, params1, stride))
    ref1 = ref_forward(x1, params1, stride)
    assert out1.shape == (N, planes, H // stride, W // stride)
    err1 = float(jnp.max(jnp.abs(out1 - ref1)))
    assert jnp.allclose(out1, ref1, atol=3e-2, rtol=3e-2), err1

    # Config 2: identity shortcut (stride=1, same channels 8 -> 8).
    Cin2, planes2, stride2 = 8, 8, 1
    x2 = jax.random.normal(kx2, (N, Cin2, H, W), jnp.float32)
    params2 = init_params(kp2, Cin2, planes2, stride2)
    out2 = jax.block_until_ready(fwd(x2, params2, stride2))
    ref2 = ref_forward(x2, params2, stride2)
    assert out2.shape == (N, planes2, H, W)
    err2 = float(jnp.max(jnp.abs(out2 - ref2)))
    assert jnp.allclose(out2, ref2, atol=3e-2, rtol=3e-2), err2

    print("KERNEL_OK")
</pallas_src>

<mosaic_0001>
module attributes {stable_mosaic.version = 11 : i64} {
  func.func @_conv_bn_act_kernel(%arg0: i32, %arg1: memref<1x4x9x9x4xbf16, #tpu.memory_space<vmem>>, %arg2: memref<36x8xbf16, #tpu.memory_space<vmem>>, %arg3: memref<1x8xf32, #tpu.memory_space<vmem>>, %arg4: memref<1x8x8x8xbf16, #tpu.memory_space<vmem>>, %arg5: memref<1x8x8x36xbf16, #tpu.memory_space<vmem>>) attributes {dimension_semantics = [#tpu.dimension_semantics<parallel>], iteration_bounds = array<i64: 2>, scalar_prefetch = 0 : i64, scratch_operands = 1 : i64, tpu.core_type = #tpu.core_type<tc>, window_params = [{transform_indices = @transform_0, window_bounds = array<i64: 1, 4, 9, 9, 4>}, {pipeline_mode = #tpu.pipeline_mode<synchronous>, transform_indices = @transform_1, window_bounds = array<i64: 36, 8>}, {pipeline_mode = #tpu.pipeline_mode<synchronous>, transform_indices = @transform_2, window_bounds = array<i64: 1, 8>}, {transform_indices = @transform_3, window_bounds = array<i64: 1, 8, 8, 8>}]} {
    %c0 = arith.constant 0 : index
    %c0_0 = arith.constant 0 : index
    %c0_1 = arith.constant 0 : index
    %c0_2 = arith.constant 0 : index
    %c0_3 = arith.constant 0 : index
    %0 = vector.load %arg1[%c0, %c0_0, %c0_1, %c0_2, %c0_3] : memref<1x4x9x9x4xbf16, #tpu.memory_space<vmem>>, vector<1x1x8x8x4xbf16>
    %1 = vector.shape_cast %0 : vector<1x1x8x8x4xbf16> to vector<1x8x8x4xbf16>
    %c0_4 = arith.constant 0 : index
    %c0_5 = arith.constant 0 : index
    %c0_6 = arith.constant 0 : index
    %c0_7 = arith.constant 0 : index
    %2 = vector.load %arg5[%c0_4, %c0_5, %c0_6, %c0_7] : memref<1x8x8x36xbf16, #tpu.memory_space<vmem>>, vector<1x8x8x4xbf16>
    tpu.vector_store %arg5[%c0_4, %c0_5, %c0_6, %c0_7], %1 {strides = array<i32>} : memref<1x8x8x36xbf16, #tpu.memory_space<vmem>>, vector<1x8x8x4xbf16>,
    %c0_8 = arith.constant 0 : index
    %c1 = arith.constant 1 : index
    %c0_9 = arith.constant 0 : index
    %c0_10 = arith.constant 0 : index
    %c0_11 = arith.constant 0 : index
    %3 = vector.load %arg1[%c0_8, %c1, %c0_9, %c0_10, %c0_11] : memref<1x4x9x9x4xbf16, #tpu.memory_space<vmem>>, vector<1x1x8x8x4xbf16>
    %4 = vector.shape_cast %3 : vector<1x1x8x8x4xbf16> to vector<1x8x8x4xbf16>
    %c0_12 = arith.constant 0 : index
    %c0_13 = arith.constant 0 : index
    %c0_14 = arith.constant 0 : index
    %c4 = arith.constant 4 : index
    %5 = vector.load %arg5[%c0_12, %c0_13, %c0_14, %c4] : memref<1x8x8x36xbf16, #tpu.memory_space<vmem>>, vector<1x8x8x4xbf16>
    tpu.vector_store %arg5[%c0_12, %c0_13, %c0_14, %c4], %4 {strides = array<i32>} : memref<1x8x8x36xbf16, #tpu.memory_space<vmem>>, vector<1x8x8x4xbf16>,
    %c0_15 = arith.constant 0 : index
    %c0_16 = arith.constant 0 : index
    %c0_17 = arith.constant 0 : index
    %c1_18 = arith.constant 1 : index
    %c0_19 = arith.constant 0 : index
    %6 = vector.load %arg1[%c0_15, %c0_16, %c0_17, %c1_18, %c0_19] : memref<1x4x9x9x4xbf16, #tpu.memory_space<vmem>>, vector<1x1x8x8x4xbf16>
    %7 = vector.shape_cast %6 : vector<1x1x8x8x4xbf16> to vector<1x8x8x4xbf16>
    %c0_20 = arith.constant 0 : index
    %c0_21 = arith.constant 0 : index
    %c0_22 = arith.constant 0 : index
    %c8 = arith.constant 8 : index
    %8 = vector.load %arg5[%c0_20, %c0_21, %c0_22, %c8] : memref<1x8x8x36xbf16, #tpu.memory_space<vmem>>, vector<1x8x8x4xbf16>
    tpu.vector_store %arg5[%c0_20, %c0_21, %c0_22, %c8], %7 {strides = array<i32>} : memref<1x8x8x36xbf16, #tpu.memory_space<vmem>>, vector<1x8x8x4xbf16>,
    %c0_23 = arith.constant 0 : index
    %c2 = arith.constant 2 : index
    %c0_24 = arith.constant 0 : index
    %c0_25 = arith.constant 0 : index
    %c0_26 = arith.constant 0 : index
    %9 = vector.load %arg1[%c0_23, %c2, %c0_24, %c0_25, %c0_26] : memref<1x4x9x9x4xbf16, #tpu.memory_space<vmem>>, vector<1x1x8x8x4xbf16>
    %10 = vector.shape_cast %9 : vector<1x1x8x8x4xbf16> to vector<1x8x8x4xbf16>
    %c0_27 = arith.constant 0 : index
    %c0_28 = arith.constant 0 : index
    %c0_29 = arith.constant 0 : index
    %c12 = arith.constant 12 : index
    %11 = vector.load %arg5[%c0_27, %c0_28, %c0_29, %c12] : memref<1x8x8x36xbf16, #tpu.memory_space<vmem>>, vector<1x8x8x4xbf16>
    tpu.vector_store %arg5[%c0_27, %c0_28, %c0_29, %c12], %10 {strides = array<i32>} : memref<1x8x8x36xbf16, #tpu.memory_space<vmem>>, vector<1x8x8x4xbf16>,
    %c0_30 = arith.constant 0 : index
    %c3 = arith.constant 3 : index
    %c0_31 = arith.constant 0 : index
    %c0_32 = arith.constant 0 : index
    %c0_33 = arith.constant 0 : index
    %12 = vector.load %arg1[%c0_30, %c3, %c0_31, %c0_32, %c0_33] : memref<1x4x9x9x4xbf16, #tpu.memory_space<vmem>>, vector<1x1x8x8x4xbf16>
    %13 = vector.shape_cast %12 : vector<1x1x8x8x4xbf16> to vector<1x8x8x4xbf16>
    %c0_34 = arith.constant 0 : index
    %c0_35 = arith.constant 0 : index
    %c0_36 = arith.constant 0 : index
    %c16 = arith.constant 16 : index
    %14 = vector.load %arg5[%c0_34, %c0_35, %c0_36, %c16] : memref<1x8x8x36xbf16, #tpu.memory_space<vmem>>, vector<1x8x8x4xbf16>
    tpu.vector_store %arg5[%c0_34, %c0_35, %c0_36, %c16], %13 {strides = array<i32>} : memref<1x8x8x36xbf16, #tpu.memory_space<vmem>>, vector<1x8x8x4xbf16>,
    %c0_37 = arith.constant 0 : index
    %c2_38 = arith.constant 2 : index
    %c0_39 = arith.constant 0 : index
    %c1_40 = arith.constant 1 : index
    %c0_41 = arith.constant 0 : index
    %15 = vector.load %arg1[%c0_37, %c2_38, %c0_39, %c1_40, %c0_41] : memref<1x4x9x9x4xbf16, #tpu.memory_space<vmem>>, vector<1x1x8x8x4xbf16>
    %16 = vector.shape_cast %15 : vector<1x1x8x8x4xbf16> to vector<1x8x8x4xbf16>
    %c0_42 = arith.constant 0 : index
    %c0_43 = arith.constant 0 : index
    %c0_44 = arith.constant 0 : index
    %c20 = arith.constant 20 : index
    %17 = vector.load %arg5[%c0_42, %c0_43, %c0_44, %c20] : memref<1x8x8x36xbf16, #tpu.memory_space<vmem>>, vector<1x8x8x4xbf16>
    tpu.vector_store %arg5[%c0_42, %c0_43, %c0_44, %c20], %16 {strides = array<i32>} : memref<1x8x8x36xbf16, #tpu.memory_space<vmem>>, vector<1x8x8x4xbf16>,
    %c0_45 = arith.constant 0 : index
    %c0_46 = arith.constant 0 : index
    %c1_47 = arith.constant 1 : index
    %c0_48 = arith.constant 0 : index
    %c0_49 = arith.constant 0 : index
    %18 = vector.load %arg1[%c0_45, %c0_46, %c1_47, %c0_48, %c0_49] : memref<1x4x9x9x4xbf16, #tpu.memory_space<vmem>>, vector<1x1x8x8x4xbf16>
    %19 = vector.shape_cast %18 : vector<1x1x8x8x4xbf16> to vector<1x8x8x4xbf16>
    %c0_50 = arith.constant 0 : index
    %c0_51 = arith.constant 0 : index
    %c0_52 = arith.constant 0 : index
    %c24 = arith.constant 24 : index
    %20 = vector.load %arg5[%c0_50, %c0_51, %c0_52, %c24] : memref<1x8x8x36xbf16, #tpu.memory_space<vmem>>, vector<1x8x8x4xbf16>
    tpu.vector_store %arg5[%c0_50, %c0_51, %c0_52, %c24], %19 {strides = array<i32>} : memref<1x8x8x36xbf16, #tpu.memory_space<vmem>>, vector<1x8x8x4xbf16>,
    %c0_53 = arith.constant 0 : index
    %c1_54 = arith.constant 1 : index
    %c1_55 = arith.constant 1 : index
    %c0_56 = arith.constant 0 : index
    %c0_57 = arith.constant 0 : index
    %21 = vector.load %arg1[%c0_53, %c1_54, %c1_55, %c0_56, %c0_57] : memref<1x4x9x9x4xbf16, #tpu.memory_space<vmem>>, vector<1x1x8x8x4xbf16>
    %22 = vector.shape_cast %21 : vector<1x1x8x8x4xbf16> to vector<1x8x8x4xbf16>
    %c0_58 = arith.constant 0 : index
    %c0_59 = arith.constant 0 : index
    %c0_60 = arith.constant 0 : index
    %c28 = arith.constant 28 : index
    %23 = vector.load %arg5[%c0_58, %c0_59, %c0_60, %c28] : memref<1x8x8x36xbf16, #tpu.memory_space<vmem>>, vector<1x8x8x4xbf16>
    tpu.vector_store %arg5[%c0_58, %c0_59, %c0_60, %c28], %22 {strides = array<i32>} : memref<1x8x8x36xbf16, #tpu.memory_space<vmem>>, vector<1x8x8x4xbf16>,
    %c0_61 = arith.constant 0 : index
    %c0_62 = arith.constant 0 : index
    %c1_63 = arith.constant 1 : index
    %c1_64 = arith.constant 1 : index
    %c0_65 = arith.constant 0 : index
    %24 = vector.load %arg1[%c0_61, %c0_62, %c1_63, %c1_64, %c0_65] : memref<1x4x9x9x4xbf16, #tpu.memory_space<vmem>>, vector<1x1x8x8x4xbf16>
    %25 = vector.shape_cast %24 : vector<1x1x8x8x4xbf16> to vector<1x8x8x4xbf16>
    %c0_66 = arith.constant 0 : index
    %c0_67 = arith.constant 0 : index
    %c0_68 = arith.constant 0 : index
    %c32 = arith.constant 32 : index
    %26 = vector.load %arg5[%c0_66, %c0_67, %c0_68, %c32] : memref<1x8x8x36xbf16, #tpu.memory_space<vmem>>, vector<1x8x8x4xbf16>
    tpu.vector_store %arg5[%c0_66, %c0_67, %c0_68, %c32], %25 {strides = array<i32>} : memref<1x8x8x36xbf16, #tpu.memory_space<vmem>>, vector<1x8x8x4xbf16>,
    %c0_69 = arith.constant 0 : index
    %c0_70 = arith.constant 0 : index
    %c0_71 = arith.constant 0 : index
    %c0_72 = arith.constant 0 : index
    %27 = vector.load %arg5[%c0_69, %c0_70, %c0_71, %c0_72] : memref<1x8x8x36xbf16, #tpu.memory_space<vmem>>, vector<1x8x8x36xbf16>
    %28 = vector.shape_cast %27 : vector<1x8x8x36xbf16> to vector<64x36xbf16>
    %c0_73 = arith.constant 0 : index
    %c0_74 = arith.constant 0 : index
    %29 = vector.load %arg2[%c0_73, %c0_74] : memref<36x8xbf16, #tpu.memory_space<vmem>>, vector<36x8xbf16>
    %cst = arith.constant dense<0.000000e+00> : vector<64x8xf32>
    %30 = tpu.matmul %28, %29, %cst {dimension_numbers = #tpu.dot_dimension_numbers<[1], [0], [0], [1], [0, 0, 1, 1], [], []>} : vector<64x36xbf16>, vector<36x8xbf16>, vector<64x8xf32> -> vector<64x8xf32>
    %c0_75 = arith.constant 0 : index
    %c0_76 = arith.constant 0 : index
    %31 = vector.load %arg3[%c0_75, %c0_76] : memref<1x8xf32, #tpu.memory_space<vmem>>, vector<1x8xf32>
    %32 = vector.broadcast %31 : vector<1x8xf32> to vector<64x8xf32>
    %33 = arith.addf %30, %32 : vector<64x8xf32>
    %cst_77 = arith.constant 0.000000e+00 : f32
    %34 = vector.broadcast %cst_77 : f32 to vector<64x8xf32>
    %35 = arith.maximumf %33, %34 : vector<64x8xf32>
    %36 = vector.shape_cast %35 : vector<64x8xf32> to vector<1x8x8x8xf32>
    %37 = arith.truncf %36 : vector<1x8x8x8xf32> to vector<1x8x8x8xbf16>
    %c0_78 = arith.constant 0 : index
    %c0_79 = arith.constant 0 : index
    %c0_80 = arith.constant 0 : index
    %c0_81 = arith.constant 0 : index
    %38 = vector.load %arg4[%c0_78, %c0_79, %c0_80, %c0_81] : memref<1x8x8x8xbf16, #tpu.memory_space<vmem>>, vector<1x8x8x8xbf16>
    tpu.vector_store %arg4[%c0_78, %c0_79, %c0_80, %c0_81], %37 {strides = array<i32>} : memref<1x8x8x8xbf16, #tpu.memory_space<vmem>>, vector<1x8x8x8xbf16>,
    return
  }
  func.func @transform_0(%arg0: i32) -> (i32, i32, i32, i32, i32) {
    %c0_i32 = arith.constant 0 : i32
    %c0_i32_0 = arith.constant 0 : i32
    %c0_i32_1 = arith.constant 0 : i32
    %c0_i32_2 = arith.constant 0 : i32
    %c0_i32_3 = arith.constant 0 : i32
    return %arg0, %c0_i32, %c0_i32_0, %c0_i32_1, %c0_i32_2 : i32, i32, i32, i32, i32
  }
  func.func @transform_1(%arg0: i32) -> (i32, i32) {
    %c0_i32 = arith.constant 0 : i32
    %c0_i32_0 = arith.constant 0 : i32
    %c0_i32_1 = arith.constant 0 : i32
    return %c0_i32, %c0_i32_0 : i32, i32
  }
  func.func @transform_2(%arg0: i32) -> (i32, i32) {
    %c0_i32 = arith.constant 0 : i32
    %c0_i32_0 = arith.constant 0 : i32
    %c0_i32_1 = arith.constant 0 : i32
    return %c0_i32, %c0_i32_0 : i32, i32
  }
  func.func @transform_3(%arg0: i32) -> (i32, i32, i32, i32) {
    %c0_i32 = arith.constant 0 : i32
    %c0_i32_0 = arith.constant 0 : i32
    %c0_i32_1 = arith.constant 0 : i32
    %c0_i32_2 = arith.constant 0 : i32
    return %arg0, %c0_i32, %c0_i32_0, %c0_i32_1 : i32, i32, i32, i32
  }
}

module attributes {stable_mosaic.version = 11 : i64} {
  func.func @_conv_bn_act_kernel(%arg0: i32, %arg1: memref<1x8x8x8xbf16, #tpu.memory_space<vmem>>, %arg2: memref<1x8x8x4xbf16, #tpu.memory_space<vmem>>, %arg3: memref<76x8xbf16, #tpu.memory_space<vmem>>, %arg4: memref<1x8xf32, #tpu.memory_space<vmem>>, %arg5: memref<1x8x8x8xf32, #tpu.memory_space<vmem>>, %arg6: memref<1x10x10x8xbf16, #tpu.memory_space<vmem>>, %arg7: memref<1x8x8x76xbf16, #tpu.memory_space<vmem>>) attributes {dimension_semantics = [#tpu.dimension_semantics<parallel>], iteration_bounds = array<i64: 2>, scalar_prefetch = 0 : i64, scratch_operands = 2 : i64, tpu.core_type = #tpu.core_type<tc>, window_params = [{transform_indices = @transform_0, window_bounds = array<i64: 1, 8, 8, 8>}, {transform_indices = @transform_1, window_bounds = array<i64: 1, 8, 8, 4>}, {pipeline_mode = #tpu.pipeline_mode<synchronous>, transform_indices = @transform_2, window_bounds = array<i64: 76, 8>}, {pipeline_mode = #tpu.pipeline_mode<synchronous>, transform_indices = @transform_3, window_bounds = array<i64: 1, 8>}, {transform_indices = @transform_4, window_bounds = array<i64: 1, 8, 8, 8>}]} {
    %cst = arith.constant 0.000000e+00 : bf16
    %0 = vector.broadcast %cst : bf16 to vector<1x1x10x8xbf16>
    %cst_0 = arith.constant 0.000000e+00 : bf16
    %1 = vector.broadcast %cst_0 : bf16 to vector<1x10x1x8xbf16>
    %c0 = arith.constant 0 : index
    %c0_1 = arith.constant 0 : index
    %c0_2 = arith.constant 0 : index
    %c0_3 = arith.constant 0 : index
    %2 = vector.load %arg6[%c0, %c0_1, %c0_2, %c0_3] : memref<1x10x10x8xbf16, #tpu.memory_space<vmem>>, vector<1x1x10x8xbf16>
    tpu.vector_store %arg6[%c0, %c0_1, %c0_2, %c0_3], %0 {strides = array<i32>} : memref<1x10x10x8xbf16, #tpu.memory_space<vmem>>, vector<1x1x10x8xbf16>,
    %c0_4 = arith.constant 0 : index
    %c9 = arith.constant 9 : index
    %c0_5 = arith.constant 0 : index
    %c0_6 = arith.constant 0 : index
    %3 = vector.load %arg6[%c0_4, %c9, %c0_5, %c0_6] : memref<1x10x10x8xbf16, #tpu.memory_space<vmem>>, vector<1x1x10x8xbf16>
    tpu.vector_store %arg6[%c0_4, %c9, %c0_5, %c0_6], %0 {strides = array<i32>} : memref<1x10x10x8xbf16, #tpu.memory_space<vmem>>, vector<1x1x10x8xbf16>,
    %c0_7 = arith.constant 0 : index
    %c0_8 = arith.constant 0 : index
    %c0_9 = arith.constant 0 : index
    %c0_10 = arith.constant 0 : index
    %4 = vector.load %arg6[%c0_7, %c0_8, %c0_9, %c0_10] : memref<1x10x10x8xbf16, #tpu.memory_space<vmem>>, vector<1x10x1x8xbf16>
    tpu.vector_store %arg6[%c0_7, %c0_8, %c0_9, %c0_10], %1 {strides = array<i32>} : memref<1x10x10x8xbf16, #tpu.memory_space<vmem>>, vector<1x10x1x8xbf16>,
    %c0_11 = arith.constant 0 : index
    %c0_12 = arith.constant 0 : index
    %c9_13 = arith.constant 9 : index
    %c0_14 = arith.constant 0 : index
    %5 = vector.load %arg6[%c0_11, %c0_12, %c9_13, %c0_14] : memref<1x10x10x8xbf16, #tpu.memory_space<vmem>>, vector<1x10x1x8xbf16>
    tpu.vector_store %arg6[%c0_11, %c0_12, %c9_13, %c0_14], %1 {strides = array<i32>} : memref<1x10x10x8xbf16, #tpu.memory_space<vmem>>, vector<1x10x1x8xbf16>,
    %c0_15 = arith.constant 0 : index
    %c0_16 = arith.constant 0 : index
    %c0_17 = arith.constant 0 : index
    %c0_18 = arith.constant 0 : index
    %6 = vector.load %arg1[%c0_15, %c0_16, %c0_17, %c0_18] : memref<1x8x8x8xbf16, #tpu.memory_space<vmem>>, vector<1x8x8x8xbf16>
    %c0_19 = arith.constant 0 : index
    %c1 = arith.constant 1 : index
    %c1_20 = arith.constant 1 : index
    %c0_21 = arith.constant 0 : index
    %7 = vector.load %arg6[%c0_19, %c1, %c1_20, %c0_21] : memref<1x10x10x8xbf16, #tpu.memory_space<vmem>>, vector<1x8x8x8xbf16>
    tpu.vector_store %arg6[%c0_19, %c1, %c1_20, %c0_21], %6 {strides = array<i32>} : memref<1x10x10x8xbf16, #tpu.memory_space<vmem>>, vector<1x8x8x8xbf16>,
    %c0_22 = arith.constant 0 : index
    %c0_23 = arith.constant 0 : index
    %c0_24 = arith.constant 0 : index
    %c0_25 = arith.constant 0 : index
    %8 = vector.load %arg6[%c0_22, %c0_23, %c0_24, %c0_25] : memref<1x10x10x8xbf16, #tpu.memory_space<vmem>>, vector<1x8x8x8xbf16>
    %c0_26 = arith.constant 0 : index
    %c0_27 = arith.constant 0 : index
    %c0_28 = arith.constant 0 : index
    %c0_29 = arith.constant 0 : index
    %9 = vector.load %arg7[%c0_26, %c0_27, %c0_28, %c0_29] : memref<1x8x8x76xbf16, #tpu.memory_space<vmem>>, vector<1x8x8x8xbf16>
    tpu.vector_store %arg7[%c0_26, %c0_27, %c0_28, %c0_29], %8 {strides = array<i32>} : memref<1x8x8x76xbf16, #tpu.memory_space<vmem>>, vector<1x8x8x8xbf16>,
    %c0_30 = arith.constant 0 : index
    %c0_31 = arith.constant 0 : index
    %c1_32 = arith.constant 1 : index
    %c0_33 = arith.constant 0 : index
    %10 = vector.load %arg6[%c0_30, %c0_31, %c1_32, %c0_33] : memref<1x10x10x8xbf16, #tpu.memory_space<vmem>>, vector<1x8x8x8xbf16>
    %c0_34 = arith.constant 0 : index
    %c0_35 = arith.constant 0 : index
    %c0_36 = arith.constant 0 : index
    %c8 = arith.constant 8 : index
    %11 = vector.load %arg7[%c0_34, %c0_35, %c0_36, %c8] : memref<1x8x8x76xbf16, #tpu.memory_space<vmem>>, vector<1x8x8x8xbf16>
    tpu.vector_store %arg7[%c0_34, %c0_35, %c0_36, %c8], %10 {strides = array<i32>} : memref<1x8x8x76xbf16, #tpu.memory_space<vmem>>, vector<1x8x8x8xbf16>,
    %c0_37 = arith.constant 0 : index
    %c0_38 = arith.constant 0 : index
    %c2 = arith.constant 2 : index
    %c0_39 = arith.constant 0 : index
    %12 = vector.load %arg6[%c0_37, %c0_38, %c2, %c0_39] : memref<1x10x10x8xbf16, #tpu.memory_space<vmem>>, vector<1x8x8x8xbf16>
    %c0_40 = arith.constant 0 : index
    %c0_41 = arith.constant 0 : index
    %c0_42 = arith.constant 0 : index
    %c16 = arith.constant 16 : index
    %13 = vector.load %arg7[%c0_40, %c0_41, %c0_42, %c16] : memref<1x8x8x76xbf16, #tpu.memory_space<vmem>>, vector<1x8x8x8xbf16>
    tpu.vector_store %arg7[%c0_40, %c0_41, %c0_42, %c16], %12 {strides = array<i32>} : memref<1x8x8x76xbf16, #tpu.memory_space<vmem>>, vector<1x8x8x8xbf16>,
    %c0_43 = arith.constant 0 : index
    %c1_44 = arith.constant 1 : index
    %c0_45 = arith.constant 0 : index
    %c0_46 = arith.constant 0 : index
    %14 = vector.load %arg6[%c0_43, %c1_44, %c0_45, %c0_46] : memref<1x10x10x8xbf16, #tpu.memory_space<vmem>>, vector<1x8x8x8xbf16>
    %c0_47 = arith.constant 0 : index
    %c0_48 = arith.constant 0 : index
    %c0_49 = arith.constant 0 : index
    %c24 = arith.constant 24 : index
    %15 = vector.load %arg7[%c0_47, %c0_48, %c0_49, %c24] : memref<1x8x8x76xbf16, #tpu.memory_space<vmem>>, vector<1x8x8x8xbf16>
    tpu.vector_store %arg7[%c0_47, %c0_48, %c0_49, %c24], %14 {strides = array<i32>} : memref<1x8x8x76xbf16, #tpu.memory_space<vmem>>, vector<1x8x8x8xbf16>,
    %c0_50 = arith.constant 0 : index
    %c1_51 = arith.constant 1 : index
    %c1_52 = arith.constant 1 : index
    %c0_53 = arith.constant 0 : index
    %16 = vector.load %arg6[%c0_50, %c1_51, %c1_52, %c0_53] : memref<1x10x10x8xbf16, #tpu.memory_space<vmem>>, vector<1x8x8x8xbf16>
    %c0_54 = arith.constant 0 : index
    %c0_55 = arith.constant 0 : index
    %c0_56 = arith.constant 0 : index
    %c32 = arith.constant 32 : index
    %17 = vector.load %arg7[%c0_54, %c0_55, %c0_56, %c32] : memref<1x8x8x76xbf16, #tpu.memory_space<vmem>>, vector<1x8x8x8xbf16>
    tpu.vector_store %arg7[%c0_54, %c0_55, %c0_56, %c32], %16 {strides = array<i32>} : memref<1x8x8x76xbf16, #tpu.memory_space<vmem>>, vector<1x8x8x8xbf16>,
    %c0_57 = arith.constant 0 : index
    %c1_58 = arith.constant 1 : index
    %c2_59 = arith.constant 2 : index
    %c0_60 = arith.constant 0 : index
    %18 = vector.load %arg6[%c0_57, %c1_58, %c2_59, %c0_60] : memref<1x10x10x8xbf16, #tpu.memory_space<vmem>>, vector<1x8x8x8xbf16>
    %c0_61 = arith.constant 0 : index
    %c0_62 = arith.constant 0 : index
    %c0_63 = arith.constant 0 : index
    %c40 = arith.constant 40 : index
    %19 = vector.load %arg7[%c0_61, %c0_62, %c0_63, %c40] : memref<1x8x8x76xbf16, #tpu.memory_space<vmem>>, vector<1x8x8x8xbf16>
    tpu.vector_store %arg7[%c0_61, %c0_62, %c0_63, %c40], %18 {strides = array<i32>} : memref<1x8x8x76xbf16, #tpu.memory_space<vmem>>, vector<1x8x8x8xbf16>,
    %c0_64 = arith.constant 0 : index
    %c2_65 = arith.constant 2 : index
    %c0_66 = arith.constant 0 : index
    %c0_67 = arith.constant 0 : index
    %20 = vector.load %arg6[%c0_64, %c2_65, %c0_66, %c0_67] : memref<1x10x10x8xbf16, #tpu.memory_space<vmem>>, vector<1x8x8x8xbf16>
    %c0_68 = arith.constant 0 : index
    %c0_69 = arith.constant 0 : index
    %c0_70 = arith.constant 0 : index
    %c48 = arith.constant 48 : index
    %21 = vector.load %arg7[%c0_68, %c0_69, %c0_70, %c48] : memref<1x8x8x76xbf16, #tpu.memory_space<vmem>>, vector<1x8x8x8xbf16>
    tpu.vector_store %arg7[%c0_68, %c0_69, %c0_70, %c48], %20 {strides = array<i32>} : memref<1x8x8x76xbf16, #tpu.memory_space<vmem>>, vector<1x8x8x8xbf16>,
    %c0_71 = arith.constant 0 : index
    %c2_72 = arith.constant 2 : index
    %c1_73 = arith.constant 1 : index
    %c0_74 = arith.constant 0 : index
    %22 = vector.load %arg6[%c0_71, %c2_72, %c1_73, %c0_74] : memref<1x10x10x8xbf16, #tpu.memory_space<vmem>>, vector<1x8x8x8xbf16>
    %c0_75 = arith.constant 0 : index
    %c0_76 = arith.constant 0 : index
    %c0_77 = arith.constant 0 : index
    %c56 = arith.constant 56 : index
    %23 = vector.load %arg7[%c0_75, %c0_76, %c0_77, %c56] : memref<1x8x8x76xbf16, #tpu.memory_space<vmem>>, vector<1x8x8x8xbf16>
    tpu.vector_store %arg7[%c0_75, %c0_76, %c0_77, %c56], %22 {strides = array<i32>} : memref<1x8x8x76xbf16, #tpu.memory_space<vmem>>, vector<1x8x8x8xbf16>,
    %c0_78 = arith.constant 0 : index
    %c2_79 = arith.constant 2 : index
    %c2_80 = arith.constant 2 : index
    %c0_81 = arith.constant 0 : index
    %24 = vector.load %arg6[%c0_78, %c2_79, %c2_80, %c0_81] : memref<1x10x10x8xbf16, #tpu.memory_space<vmem>>, vector<1x8x8x8xbf16>
    %c0_82 = arith.constant 0 : index
    %c0_83 = arith.constant 0 : index
    %c0_84 = arith.constant 0 : index
    %c64 = arith.constant 64 : index
    %25 = vector.load %arg7[%c0_82, %c0_83, %c0_84, %c64] : memref<1x8x8x76xbf16, #tpu.memory_space<vmem>>, vector<1x8x8x8xbf16>
    tpu.vector_store %arg7[%c0_82, %c0_83, %c0_84, %c64], %24 {strides = array<i32>} : memref<1x8x8x76xbf16, #tpu.memory_space<vmem>>, vector<1x8x8x8xbf16>,
    %c0_85 = arith.constant 0 : index
    %c0_86 = arith.constant 0 : index
    %c0_87 = arith.constant 0 : index
    %c0_88 = arith.constant 0 : index
    %26 = vector.load %arg2[%c0_85, %c0_86, %c0_87, %c0_88] : memref<1x8x8x4xbf16, #tpu.memory_space<vmem>>, vector<1x8x8x4xbf16>
    %c0_89 = arith.constant 0 : index
    %c0_90 = arith.constant 0 : index
    %c0_91 = arith.constant 0 : index
    %c72 = arith.constant 72 : index
    %27 = vector.load %arg7[%c0_89, %c0_90, %c0_91, %c72] : memref<1x8x8x76xbf16, #tpu.memory_space<vmem>>, vector<1x8x8x4xbf16>
    tpu.vector_store %arg7[%c0_89, %c0_90, %c0_91, %c72], %26 {strides = array<i32>} : memref<1x8x8x76xbf16, #tpu.memory_space<vmem>>, vector<1x8x8x4xbf16>,
    %c0_92 = arith.constant 0 : index
    %c0_93 = arith.constant 0 : index
    %c0_94 = arith.constant 0 : index
    %c0_95 = arith.constant 0 : index
    %28 = vector.load %arg7[%c0_92, %c0_93, %c0_94, %c0_95] : memref<1x8x8x76xbf16, #tpu.memory_space<vmem>>, vector<1x8x8x76xbf16>
    %29 = vector.shape_cast %28 : vector<1x8x8x76xbf16> to vector<64x76xbf16>
    %c0_96 = arith.constant 0 : index
    %c0_97 = arith.constant 0 : index
    %30 = vector.load %arg3[%c0_96, %c0_97] : memref<76x8xbf16, #tpu.memory_space<vmem>>, vector<76x8xbf16>
    %cst_98 = arith.constant dense<0.000000e+00> : vector<64x8xf32>
    %31 = tpu.matmul %29, %30, %cst_98 {dimension_numbers = #tpu.dot_dimension_numbers<[1], [0], [0], [1], [0, 0, 1, 1], [], []>} : vector<64x76xbf16>, vector<76x8xbf16>, vector<64x8xf32> -> vector<64x8xf32>
    %c0_99 = arith.constant 0 : index
    %c0_100 = arith.constant 0 : index
    %32 = vector.load %arg4[%c0_99, %c0_100] : memref<1x8xf32, #tpu.memory_space<vmem>>, vector<1x8xf32>
    %33 = vector.broadcast %32 : vector<1x8xf32> to vector<64x8xf32>
    %34 = arith.addf %31, %33 : vector<64x8xf32>
    %cst_101 = arith.constant 0.000000e+00 : f32
    %35 = vector.broadcast %cst_101 : f32 to vector<64x8xf32>
    %36 = arith.maximumf %34, %35 : vector<64x8xf32>
    %37 = vector.shape_cast %36 : vector<64x8xf32> to vector<1x8x8x8xf32>
    %c0_102 = arith.constant 0 : index
    %c0_103 = arith.constant 0 : index
    %c0_104 = arith.constant 0 : index
    %c0_105 = arith.constant 0 : index
    %38 = vector.load %arg5[%c0_102, %c0_103, %c0_104, %c0_105] : memref<1x8x8x8xf32, #tpu.memory_space<vmem>>, vector<1x8x8x8xf32>
    tpu.vector_store %arg5[%c0_102, %c0_103, %c0_104, %c0_105], %37 {strides = array<i32>} : memref<1x8x8x8xf32, #tpu.memory_space<vmem>>, vector<1x8x8x8xf32>,
    return
  }
  func.func @transform_0(%arg0: i32) -> (i32, i32, i32, i32) {
    %c0_i32 = arith.constant 0 : i32
    %c0_i32_0 = arith.constant 0 : i32
    %c0_i32_1 = arith.constant 0 : i32
    %c0_i32_2 = arith.constant 0 : i32
    return %arg0, %c0_i32, %c0_i32_0, %c0_i32_1 : i32, i32, i32, i32
  }
  func.func @transform_1(%arg0: i32) -> (i32, i32, i32, i32) {
    %c0_i32 = arith.constant 0 : i32
    %c0_i32_0 = arith.constant 0 : i32
    %c0_i32_1 = arith.constant 0 : i32
    %c0_i32_2 = arith.constant 0 : i32
    return %arg0, %c0_i32, %c0_i32_0, %c0_i32_1 : i32, i32, i32, i32
  }
  func.func @transform_2(%arg0: i32) -> (i32, i32) {
    %c0_i32 = arith.constant 0 : i32
    %c0_i32_0 = arith.constant 0 : i32
    %c0_i32_1 = arith.constant 0 : i32
    return %c0_i32, %c0_i32_0 : i32, i32
  }
  func.func @transform_3(%arg0: i32) -> (i32, i32) {
    %c0_i32 = arith.constant 0 : i32
    %c0_i32_0 = arith.constant 0 : i32
    %c0_i32_1 = arith.constant 0 : i32
    return %c0_i32, %c0_i32_0 : i32, i32
  }
  func.func @transform_4(%arg0: i32) -> (i32, i32, i32, i32) {
    %c0_i32 = arith.constant 0 : i32
    %c0_i32_0 = arith.constant 0 : i32
    %c0_i32_1 = arith.constant 0 : i32
    %c0_i32_2 = arith.constant 0 : i32
    return %arg0, %c0_i32, %c0_i32_0, %c0_i32_1 : i32, i32, i32, i32
  }
}

</mosaic_0001>

<llo_original>
// kernel: basic_block_forward.2
$region0: #{basic_block_forward.2}
  #allocation0 [shape = 'u32[]', space=smem, size = 0x4, offset = 0x4, fixed_abs, tag = 'smem constant byte address 0x4 - core index']
  #allocation1 [shape = 'u32[144,128]{1,0:T(1,128)}', space=vmem, size = 0x12000, scoped, tag = 'internal scratch']
  #allocation2 [shape = 'bf16[1,8,8,36]{3,2,1,0:T(8,128)(2,1)}', space=vmem, size = 0x4000, scoped, tag = 'scratch operand']
  %s0 = inlined_call_operand.vmem [shape: bf16[2,4,9,9,4], index: 0, kind: input, shape index: {}]
  %s1 = inlined_call_operand.vmem [shape: bf16[36,8], index: 1, kind: input, shape index: {}]
  %s2 = inlined_call_operand.vmem [shape: f32[1,8], index: 2, kind: input, shape index: {}]
  %s3 = inlined_call_operand.vmem [shape: bf16[2,8,8,8], index: 3, kind: output, shape index: {}]
  %s4 = sld [smem:[#allocation0]]
  $region45: #{basic_block_forward.2} parent=0
    _
  %s6 = ssub.s32 1, %s4
  %s7 = scalar_select 0, %s6, %s4
  loop: start=0, step=1, limit=4
  $region2: #{basic_block_forward.2} parent=0 // loop_pre_header
    _
  $region3: #{basic_block_forward.2} parent=0 // loop_header
    %s9 = sphi 0, %s13
    %p10 = scmp.ge.s32.totalorder %s9, 4
    %s19 = sphi 0, %s21
    %s22 = sphi 0, %s19
    %s23 = sphi 0, %s22
    %s39 = sphi 0, %s23
    %s43 = sphi 0, %s43
    %s45 = sphi 0, %s43
    %s46 = sphi 0, %s45
    %s60 = sphi 0, %s46
    %s64 = sphi 0, %s64
    %s66 = sphi 0, %s64
    %s67 = sphi 0, %s66
    %s81 = sphi 0, %s67
    %s87 = sphi 0, %s89
    %s90 = sphi 0, %s87
    %s91 = sphi 0, %s90
    %s107 = sphi 0, %s91
  $region4: #{basic_block_forward.2} parent=0 // loop_header_branch
    %12 = sbr.rel (%p10) target = $region8
  $region5: #{basic_block_forward.2} parent=0 // loop_body
    %s14 = ssub.s32 %s9, 1
    %s15 = ssub.s32 %s9, 2
    %s16 = sadd.s32 %s9, 1
    %s17 = ssub.s32 %s9, %s16
    %p18 = scmp.eq.s32.totalorder %s17, 0
    %s20 = sadd.s32 %s19, 1
    %s21 = scalar_select %p18, %s19, %s20
    %p24 = pneg %p18
    %p25 = scmp.eq.s32.totalorder %s9, 1
    %p26 = por %p24, %p25
    %p27 = scmp.ne.s32.totalorder %s19, %s22
    %p28 = scmp.eq.s32.totalorder %s9, 0
    %p29 = por %p27, %p28
    %p30 = scmp.ne.s32.totalorder %s19, %s22
    %p31 = scmp.eq.s32.totalorder %s14, 1
    %p32 = por %p30, %p31
    %p33 = scmp.ne.s32.totalorder %s22, %s23
    %p34 = scmp.eq.s32.totalorder %s14, 0
    %p35 = por %p33, %p34
    %p36 = scmp.ne.s32.totalorder %s22, %s23
    %p37 = scmp.eq.s32.totalorder %s15, 1
    %p38 = por %p36, %p37
    %p40 = scmp.ne.s32.totalorder %s23, %s39
    %p41 = scmp.eq.s32.totalorder %s15, 0
    %p42 = por %p40, %p41
    %s44 = sadd.s32 %s43, 1
    %p47 = scmp.eq.s32.totalorder %s9, 1
    %p48 = scmp.ne.s32.totalorder %s43, %s45
    %p49 = scmp.eq.s32.totalorder %s9, 0
    %p50 = por %p48, %p49
    %p51 = scmp.ne.s32.totalorder %s43, %s45
    %p52 = scmp.eq.s32.totalorder %s14, 1
    %p53 = por %p51, %p52
    %p54 = scmp.ne.s32.totalorder %s45, %s46
    %p55 = scmp.eq.s32.totalorder %s14, 0
    %p56 = por %p54, %p55
    %p57 = scmp.ne.s32.totalorder %s45, %s46
    %p58 = scmp.eq.s32.totalorder %s15, 1
    %p59 = por %p57, %p58
    %p61 = scmp.ne.s32.totalorder %s46, %s60
    %p62 = scmp.eq.s32.totalorder %s15, 0
    %p63 = por %p61, %p62
    %s65 = sadd.s32 %s64, 1
    %p68 = scmp.eq.s32.totalorder %s9, 1
    %p69 = scmp.ne.s32.totalorder %s64, %s66
    %p70 = scmp.eq.s32.totalorder %s9, 0
    %p71 = por %p69, %p70
    %p72 = scmp.ne.s32.totalorder %s64, %s66
    %p73 = scmp.eq.s32.totalorder %s14, 1
    %p74 = por %p72, %p73
    %p75 = scmp.ne.s32.totalorder %s66, %s67
    %p76 = scmp.eq.s32.totalorder %s14, 0
    %p77 = por %p75, %p76
    %p78 = scmp.ne.s32.totalorder %s66, %s67
    %p79 = scmp.eq.s32.totalorder %s15, 1
    %p80 = por %p78, %p79
    %p82 = scmp.ne.s32.totalorder %s67, %s81
    %p83 = scmp.eq.s32.totalorder %s15, 0
    %p84 = por %p82, %p83
    %s85 = ssub.s32 %s9, %s16
    %p86 = scmp.eq.s32.totalorder %s85, 0
    %s88 = sadd.s32 %s87, 1
    %s89 = scalar_select %p86, %s87, %s88
    %p92 = pneg %p86
    %p93 = scmp.eq.s32.totalorder %s9, 1
    %p94 = por %p92, %p93
    %p95 = scmp.ne.s32.totalorder %s87, %s90
    %p96 = scmp.eq.s32.totalorder %s9, 0
    %p97 = por %p95, %p96
    %p98 = scmp.ne.s32.totalorder %s87, %s90
    %p99 = scmp.eq.s32.totalorder %s14, 1
    %p100 = por %p98, %p99
    %p101 = scmp.ne.s32.totalorder %s90, %s91
    %p102 = scmp.eq.s32.totalorder %s14, 0
    %p103 = por %p101, %p102
    %p104 = scmp.ne.s32.totalorder %s90, %s91
    %p105 = scmp.eq.s32.totalorder %s15, 1
    %p106 = por %p104, %p105
    %p108 = scmp.ne.s32.totalorder %s91, %s107
    %p109 = scmp.eq.s32.totalorder %s15, 0
    %p110 = por %p108, %p109
    %p111 = scmp.le.s32.totalorder 1, %s9
    %p112 = scmp.lt.s32.totalorder %s9, 3
    %p113 = pnand %p111, %p112
    %p114 = pneg %p113
    // Predicated region
    $region9: #{basic_block_forward.2} parent=5 // pred_check
      _
    $region10: #{basic_block_forward.2} parent=5 // pred_check_branch
      %116 = sbr.rel (%p113) target = $region12
    $region11: #{basic_block_forward.2} parent=5 // pred_region
      %s117 = ssub.s32 %s9, 1
      // Predicated region
      $region13: #{basic_block_forward.2} parent=11 // pred_check
        %p118 = pneg %p56
      $region14: #{basic_block_forward.2} parent=11 // pred_check_branch
        %120 = sbr.rel (%p118) target = $region16
      $region15: #{basic_block_forward.2} parent=11 // pred_region
        _
      $region16: #{basic_block_forward.2} parent=11 // pred_fallthru
        _
      // Predicated region
      $region17: #{basic_block_forward.2} parent=11 // pred_check
        %p121 = pneg %p77
      $region18: #{basic_block_forward.2} parent=11 // pred_check_branch
        %123 = sbr.rel (%p121) target = $region20
      $region19: #{basic_block_forward.2} parent=11 // pred_region
        _
      $region20: #{basic_block_forward.2} parent=11 // pred_fallthru
        _
    $region12: #{basic_block_forward.2} parent=5 // pred_fallthru
      _
    %p124 = scmp.lt.s32.totalorder %s9, 2
    // Predicated region
    $region21: #{basic_block_forward.2} parent=5 // pred_check
      %p125 = pneg %p124
    $region22: #{basic_block_forward.2} parent=5 // pred_check_branch
      %127 = sbr.rel (%p125) target = $region24
    $region23: #{basic_block_forward.2} parent=5 // pred_region
      // Predicated region
      $region25: #{basic_block_forward.2} parent=23 // pred_check
        %p128 = pneg %p29
      $region26: #{basic_block_forward.2} parent=23 // pred_check_branch
        %130 = sbr.rel (%p128) target = $region28
      $region27: #{basic_block_forward.2} parent=23 // pred_region
        %p131 = scmp.lt.s32.totalorder %s9, 1
        %s132 = scalar_select %p131, %s9, 1
        %s133 = smul.addr %s132, 72
        %s134 = smul.addr %s133, 4
        %s135 = scalar_lea.vmem %s0, %s134
      $region28: #{basic_block_forward.2} parent=23 // pred_fallthru
        _
    $region24: #{basic_block_forward.2} parent=5 // pred_fallthru
      _
    %p136 = scmp.le.s32.totalorder 1, %s9
    %p137 = scmp.lt.s32.totalorder %s9, 3
    %p138 = pnand %p136, %p137
    %p139 = pneg %p138
    // Predicated region
    $region29: #{basic_block_forward.2} parent=5 // pred_check
      _
    $region30: #{basic_block_forward.2} parent=5 // pred_check_branch
      %141 = sbr.rel (%p138) target = $region32
    $region31: #{basic_block_forward.2} parent=5 // pred_region
      %s142 = ssub.s32 %s9, 1
      %p143 = scmp.lt.s32.totalorder %s14, 1
      %s144 = scalar_select %p143, %s14, 1
      %s145 = smul.addr %s144, 72
      %s146 = smul.addr %s145, 4
      %s147 = scalar_lea.vmem %s0, %s146
      %p148 = pneg %p35
      %p149 = pneg %p32
      %p150 = pneg %p56
      %p151 = pneg %p53
      %p152 = pneg %p77
      %p153 = pneg %p74
      %p154 = pneg %p103
      %p155 = pneg %p100
      %p156 = scmp.lt.s32.totalorder %s14, 1
      %s157 = scalar_select %p156, %s14, 1
      %s158 = smul.addr %s157, 8
      %s159 = smul.addr %s158, 4
      %s160 = scalar_lea.vmem %s3, %s159
      %p161 = scmp.lt.s32.totalorder %s14, 1
      %s162 = scalar_select %p161, %s14, 1
      %s163 = smul.addr %s162, 72
      %s164 = smul.addr %s163, 4
      %s165 = scalar_lea.vmem %s0, %s164
      %p166 = scmp.lt.s32.totalorder %s14, 1
      %s167 = scalar_select %p166, %s14, 1
      %s168 = smul.addr %s167, 8
      %s169 = smul.addr %s168, 4
      %s170 = scalar_lea.vmem %s3, %s169
      %v172 = vld [vmem:[%s165] sm:$0xf]
      %v173 = vld [vmem:[%s165 + $0x8] sm:$0xf]
      %v174 = vld [vmem:[%s165 + $0x10] sm:$0xf]
      %v175 = vld [vmem:[%s165 + $0x18] sm:$0xf]
      %v176 = vld [vmem:[%s165 + $0x20] sm:$0xf]
      %v177 = vld [vmem:[%s165 + $0x28] sm:$0xf]
      %v178 = vld [vmem:[%s165 + $0x30] sm:$0xf]
      %v179 = vld [vmem:[%s165 + $0x38] sm:$0xf]
      %vm180 = vcmask 27648
      %181 = vst.msk [vmem:[#allocation2] sm:$0xf] %vm180, %v172
      %182 = vst.msk [vmem:[#allocation2 + $0x4] sm:$0xf] %vm180, %v173
      %183 = vst.msk [vmem:[#allocation2 + $0x8] sm:$0xf] %vm180, %v174
      %184 = vst.msk [vmem:[#allocation2 + $0xc] sm:$0xf] %vm180, %v175
      %185 = vst.msk [vmem:[#allocation2 + $0x10] sm:$0xf] %vm180, %v176
      %186 = vst.msk [vmem:[#allocation2 + $0x14] sm:$0xf] %vm180, %v177
      %187 = vst.msk [vmem:[#allocation2 + $0x18] sm:$0xf] %vm180, %v178
      %188 = vst.msk [vmem:[#allocation2 + $0x1c] sm:$0xf] %vm180, %v179
      %s189 = scalar_lea.vmem %s165, 72
      %v190 = vld [vmem:[%s189] sm:$0xf]
      %v191 = vld [vmem:[%s189 + $0x8] sm:$0xf]
      %v192 = vld [vmem:[%s189 + $0x10] sm:$0xf]
      %v193 = vld [vmem:[%s189 + $0x18] sm:$0xf]
      %v194 = vld [vmem:[%s189 + $0x20] sm:$0xf]
      %v195 = vld [vmem:[%s189 + $0x28] sm:$0xf]
      %v196 = vld [vmem:[%s189 + $0x30] sm:$0xf]
      %v197 = vld [vmem:[%s189 + $0x38] sm:$0xf]
      %206 = vrot.lane.b32.xlu0 %v190, 4
      %v207 = vpop.permute.xlu0 %206
      %208 = vrot.lane.b32.xlu0 %v191, 4
      %v209 = vpop.permute.xlu0 %208
      %210 = vrot.lane.b32.xlu0 %v192, 4
      %v211 = vpop.permute.xlu0 %210
      %212 = vrot.lane.b32.xlu0 %v193, 4
      %v213 = vpop.permute.xlu0 %212
      %214 = vrot.lane.b32.xlu0 %v194, 4
      %v215 = vpop.permute.xlu0 %214
      %216 = vrot.lane.b32.xlu0 %v195, 4
      %v217 = vpop.permute.xlu0 %216
      %218 = vrot.lane.b32.xlu0 %v196, 4
      %v219 = vpop.permute.xlu0 %218
      %220 = vrot.lane.b32.xlu0 %v197, 4
      %v221 = vpop.permute.xlu0 %220
      %vm230 = vcmask 60448
      %231 = vst.msk [vmem:[#allocation2] sm:$0xf] %vm230, %v207
      %232 = vst.msk [vmem:[#allocation2 + $0x4] sm:$0xf] %vm230, %v209
      %233 = vst.msk [vmem:[#allocation2 + $0x8] sm:$0xf] %vm230, %v211
      %234 = vst.msk [vmem:[#allocation2 + $0xc] sm:$0xf] %vm230, %v213
      %235 = vst.msk [vmem:[#allocation2 + $0x10] sm:$0xf] %vm230, %v215
      %236 = vst.msk [vmem:[#allocation2 + $0x14] sm:$0xf] %vm230, %v217
      %237 = vst.msk [vmem:[#allocation2 + $0x18] sm:$0xf] %vm230, %v219
      %238 = vst.msk [vmem:[#allocation2 + $0x1c] sm:$0xf] %vm230, %v221
      %v239 = vld [vmem:[%s165] sm:$0xf]
      %v240 = vld [vmem:[%s165 + $0x4] sm:$0x1]
      %v241 = vld [vmem:[%s165 + $0x8] sm:$0xf]
      %v242 = vld [vmem:[%s165 + $0xc] sm:$0x1]
      %v243 = vld [vmem:[%s165 + $0x10] sm:$0xf]
      %v244 = vld [vmem:[%s165 + $0x14] sm:$0x1]
      %v245 = vld [vmem:[%s165 + $0x18] sm:$0xf]
      %v246 = vld [vmem:[%s165 + $0x1c] sm:$0x1]
      %v247 = vld [vmem:[%s165 + $0x20] sm:$0xf]
      %v248 = vld [vmem:[%s165 + $0x24] sm:$0x1]
      %v249 = vld [vmem:[%s165 + $0x28] sm:$0xf]
      %v250 = vld [vmem:[%s165 + $0x2c] sm:$0x1]
      %v251 = vld [vmem:[%s165 + $0x30] sm:$0xf]
      %v252 = vld [vmem:[%s165 + $0x34] sm:$0x1]
      %v253 = vld [vmem:[%s165 + $0x38] sm:$0xf]
      %v254 = vld [vmem:[%s165 + $0x3c] sm:$0x1]
      %vm255 = vsmask.f32 3328
      %vm256 = vsmask.f32 7440
      %vm257 = vmor %vm255, %vm256
      %v259 = vshrl.u32 %v239, 16
      %v261 = vrot.slane %v259, 4
      %v262 = vshll.u32 %v239, 16
      %v264 = vrot.slane %v262, 5
      %v265 = vor.u32 %v261, %v264
      %v266 = vrot.slane %v265, 4
      %v268 = vshll.u32 %v240, 16
      %v270 = vrot.slane %v268, 5
      %v271 = vsel %vm257, %v266, %v270
      %v273 = vshrl.u32 %v241, 16
      %v275 = vrot.slane %v273, 4
      %v276 = vshll.u32 %v241, 16
      %v278 = vrot.slane %v276, 5
      %v279 = vor.u32 %v275, %v278
      %v280 = vrot.slane %v279, 4
      %v282 = vshll.u32 %v242, 16
      %v284 = vrot.slane %v282, 5
      %v285 = vsel %vm257, %v280, %v284
      %v287 = vshrl.u32 %v243, 16
      %v289 = vrot.slane %v287, 4
      %v290 = vshll.u32 %v243, 16
      %v292 = vrot.slane %v290, 5
      %v293 = vor.u32 %v289, %v292
      %v294 = vrot.slane %v293, 4
      %v296 = vshll.u32 %v244, 16
      %v298 = vrot.slane %v296, 5
      %v299 = vsel %vm257, %v294, %v298
      %v301 = vshrl.u32 %v245, 16
      %v303 = vrot.slane %v301, 4
      %v304 = vshll.u32 %v245, 16
      %v306 = vrot.slane %v304, 5
      %v307 = vor.u32 %v303, %v306
      %v308 = vrot.slane %v307, 4
      %v310 = vshll.u32 %v246, 16
      %v312 = vrot.slane %v310, 5
      %v313 = vsel %vm257, %v308, %v312
      %v315 = vshrl.u32 %v247, 16
      %v317 = vrot.slane %v315, 4
      %v318 = vshll.u32 %v247, 16
      %v320 = vrot.slane %v318, 5
      %v321 = vor.u32 %v317, %v320
      %v322 = vrot.slane %v321, 4
      %v324 = vshll.u32 %v248, 16
      %v326 = vrot.slane %v324, 5
      %v327 = vsel %vm257, %v322, %v326
      %v329 = vshrl.u32 %v249, 16
      %v331 = vrot.slane %v329, 4
      %v332 = vshll.u32 %v249, 16
      %v334 = vrot.slane %v332, 5
      %v335 = vor.u32 %v331, %v334
      %v336 = vrot.slane %v335, 4
      %v338 = vshll.u32 %v250, 16
      %v340 = vrot.slane %v338, 5
      %v341 = vsel %vm257, %v336, %v340
      %v343 = vshrl.u32 %v251, 16
      %v345 = vrot.slane %v343, 4
      %v346 = vshll.u32 %v251, 16
      %v348 = vrot.slane %v346, 5
      %v349 = vor.u32 %v345, %v348
      %v350 = vrot.slane %v349, 4
      %v352 = vshll.u32 %v252, 16
      %v354 = vrot.slane %v352, 5
      %v355 = vsel %vm257, %v350, %v354
      %v357 = vshrl.u32 %v253, 16
      %v359 = vrot.slane %v357, 4
      %v360 = vshll.u32 %v253, 16
      %v362 = vrot.slane %v360, 5
      %v363 = vor.u32 %v359, %v362
      %v364 = vrot.slane %v363, 4
      %v366 = vshll.u32 %v254, 16
      %v368 = vrot.slane %v366, 5
      %v369 = vsel %vm257, %v364, %v368
      %370 = vrot.lane.b32.xlu0 %v271, 8
      %v371 = vpop.permute.xlu0 %370
      %372 = vrot.lane.b32.xlu0 %v285, 8
      %v373 = vpop.permute.xlu0 %372
      %374 = vrot.lane.b32.xlu0 %v299, 8
      %v375 = vpop.permute.xlu0 %374
      %376 = vrot.lane.b32.xlu0 %v313, 8
      %v377 = vpop.permute.xlu0 %376
      %378 = vrot.lane.b32.xlu0 %v327, 8
      %v379 = vpop.permute.xlu0 %378
      %380 = vrot.lane.b32.xlu0 %v341, 8
      %v381 = vpop.permute.xlu0 %380
      %382 = vrot.lane.b32.xlu0 %v355, 8
      %v383 = vpop.permute.xlu0 %382
      %384 = vrot.lane.b32.xlu0 %v369, 8
      %v385 = vpop.permute.xlu0 %384
      %vm394 = vcmask 93248
      %395 = vst.msk [vmem:[#allocation2] sm:$0xf] %vm394, %v371
      %396 = vst.msk [vmem:[#allocation2 + $0x4] sm:$0xf] %vm394, %v373
      %397 = vst.msk [vmem:[#allocation2 + $0x8] sm:$0xf] %vm394, %v375
      %398 = vst.msk [vmem:[#allocation2 + $0xc] sm:$0xf] %vm394, %v377
      %399 = vst.msk [vmem:[#allocation2 + $0x10] sm:$0xf] %vm394, %v379
      %400 = vst.msk [vmem:[#allocation2 + $0x14] sm:$0xf] %vm394, %v381
      %401 = vst.msk [vmem:[#allocation2 + $0x18] sm:$0xf] %vm394, %v383
      %402 = vst.msk [vmem:[#allocation2 + $0x1c] sm:$0xf] %vm394, %v385
      %s403 = scalar_lea.vmem %s165, 144
      %v404 = vld [vmem:[%s403] sm:$0xf]
      %v405 = vld [vmem:[%s403 + $0x8] sm:$0xf]
      %v406 = vld [vmem:[%s403 + $0x10] sm:$0xf]
      %v407 = vld [vmem:[%s403 + $0x18] sm:$0xf]
      %v408 = vld [vmem:[%s403 + $0x20] sm:$0xf]
      %v409 = vld [vmem:[%s403 + $0x28] sm:$0xf]
      %v410 = vld [vmem:[%s403 + $0x30] sm:$0xf]
      %v411 = vld [vmem:[%s403 + $0x38] sm:$0xf]
      %420 = vrot.lane.b32.xlu0 %v404, 12
      %v421 = vpop.permute.xlu0 %420
      %422 = vrot.lane.b32.xlu0 %v405, 12
      %v423 = vpop.permute.xlu0 %422
      %424 = vrot.lane.b32.xlu0 %v406, 12
      %v425 = vpop.permute.xlu0 %424
      %426 = vrot.lane.b32.xlu0 %v407, 12
      %v427 = vpop.permute.xlu0 %426
      %428 = vrot.lane.b32.xlu0 %v408, 12
      %v429 = vpop.permute.xlu0 %428
      %430 = vrot.lane.b32.xlu0 %v409, 12
      %v431 = vpop.permute.xlu0 %430
      %432 = vrot.lane.b32.xlu0 %v410, 12
      %v433 = vpop.permute.xlu0 %432
      %434 = vrot.lane.b32.xlu0 %v411, 12
      %v435 = vpop.permute.xlu0 %434
      %vm444 = vcmask 126048
      %445 = vst.msk [vmem:[#allocation2] sm:$0xf] %vm444, %v421
      %446 = vst.msk [vmem:[#allocation2 + $0x4] sm:$0xf] %vm444, %v423
      %447 = vst.msk [vmem:[#allocation2 + $0x8] sm:$0xf] %vm444, %v425
      %448 = vst.msk [vmem:[#allocation2 + $0xc] sm:$0xf] %vm444, %v427
      %449 = vst.msk [vmem:[#allocation2 + $0x10] sm:$0xf] %vm444, %v429
      %450 = vst.msk [vmem:[#allocation2 + $0x14] sm:$0xf] %vm444, %v431
      %451 = vst.msk [vmem:[#allocation2 + $0x18] sm:$0xf] %vm444, %v433
      %452 = vst.msk [vmem:[#allocation2 + $0x1c] sm:$0xf] %vm444, %v435
      %s453 = scalar_lea.vmem %s165, 216
      %v454 = vld [vmem:[%s453] sm:$0xf]
      %v455 = vld [vmem:[%s453 + $0x8] sm:$0xf]
      %v456 = vld [vmem:[%s453 + $0x10] sm:$0xf]
      %v457 = vld [vmem:[%s453 + $0x18] sm:$0xf]
      %v458 = vld [vmem:[%s453 + $0x20] sm:$0xf]
      %v459 = vld [vmem:[%s453 + $0x28] sm:$0xf]
      %v460 = vld [vmem:[%s453 + $0x30] sm:$0xf]
      %v461 = vld [vmem:[%s453 + $0x38] sm:$0xf]
      %470 = vrot.lane.b32.xlu0 %v454, 16
      %v471 = vpop.permute.xlu0 %470
      %472 = vrot.lane.b32.xlu0 %v455, 16
      %v473 = vpop.permute.xlu0 %472
      %474 = vrot.lane.b32.xlu0 %v456, 16
      %v475 = vpop.permute.xlu0 %474
      %476 = vrot.lane.b32.xlu0 %v457, 16
      %v477 = vpop.permute.xlu0 %476
      %478 = vrot.lane.b32.xlu0 %v458, 16
      %v479 = vpop.permute.xlu0 %478
      %480 = vrot.lane.b32.xlu0 %v459, 16
      %v481 = vpop.permute.xlu0 %480
      %482 = vrot.lane.b32.xlu0 %v460, 16
      %v483 = vpop.permute.xlu0 %482
      %484 = vrot.lane.b32.xlu0 %v461, 16
      %v485 = vpop.permute.xlu0 %484
      %vm494 = vcmask 158848
      %495 = vst.msk [vmem:[#allocation2] sm:$0xf] %vm494, %v471
      %496 = vst.msk [vmem:[#allocation2 + $0x4] sm:$0xf] %vm494, %v473
      %497 = vst.msk [vmem:[#allocation2 + $0x8] sm:$0xf] %vm494, %v475
      %498 = vst.msk [vmem:[#allocation2 + $0xc] sm:$0xf] %vm494, %v477
      %499 = vst.msk [vmem:[#allocation2 + $0x10] sm:$0xf] %vm494, %v479
      %500 = vst.msk [vmem:[#allocation2 + $0x14] sm:$0xf] %vm494, %v481
      %501 = vst.msk [vmem:[#allocation2 + $0x18] sm:$0xf] %vm494, %v483
      %502 = vst.msk [vmem:[#allocation2 + $0x1c] sm:$0xf] %vm494, %v485
      %v503 = vld [vmem:[%s403] sm:$0xf]
      %v504 = vld [vmem:[%s403 + $0x4] sm:$0x1]
      %v505 = vld [vmem:[%s403 + $0x8] sm:$0xf]
      %v506 = vld [vmem:[%s403 + $0xc] sm:$0x1]
      %v507 = vld [vmem:[%s403 + $0x10] sm:$0xf]
      %v508 = vld [vmem:[%s403 + $0x14] sm:$0x1]
      %v509 = vld [vmem:[%s403 + $0x18] sm:$0xf]
      %v510 = vld [vmem:[%s403 + $0x1c] sm:$0x1]
      %v511 = vld [vmem:[%s403 + $0x20] sm:$0xf]
      %v512 = vld [vmem:[%s403 + $0x24] sm:$0x1]
      %v513 = vld [vmem:[%s403 + $0x28] sm:$0xf]
      %v514 = vld [vmem:[%s403 + $0x2c] sm:$0x1]
      %v515 = vld [vmem:[%s403 + $0x30] sm:$0xf]
      %v516 = vld [vmem:[%s403 + $0x34] sm:$0x1]
      %v517 = vld [vmem:[%s403 + $0x38] sm:$0xf]
      %v518 = vld [vmem:[%s403 + $0x3c] sm:$0x1]
      %v520 = vshrl.u32 %v503, 16
      %v522 = vrot.slane %v520, 4
      %v523 = vshll.u32 %v503, 16
      %v525 = vrot.slane %v523, 5
      %v526 = vor.u32 %v522, %v525
      %v527 = vrot.slane %v526, 4
      %v529 = vshll.u32 %v504, 16
      %v531 = vrot.slane %v529, 5
      %v532 = vsel %vm257, %v527, %v531
      %v534 = vshrl.u32 %v505, 16
      %v536 = vrot.slane %v534, 4
      %v537 = vshll.u32 %v505, 16
      %v539 = vrot.slane %v537, 5
      %v540 = vor.u32 %v536, %v539
      %v541 = vrot.slane %v540, 4
      %v543 = vshll.u32 %v506, 16
      %v545 = vrot.slane %v543, 5
      %v546 = vsel %vm257, %v541, %v545
      %v548 = vshrl.u32 %v507, 16
      %v550 = vrot.slane %v548, 4
      %v551 = vshll.u32 %v507, 16
      %v553 = vrot.slane %v551, 5
      %v554 = vor.u32 %v550, %v553
      %v555 = vrot.slane %v554, 4
      %v557 = vshll.u32 %v508, 16
      %v559 = vrot.slane %v557, 5
      %v560 = vsel %vm257, %v555, %v559
      %v562 = vshrl.u32 %v509, 16
      %v564 = vrot.slane %v562, 4
      %v565 = vshll.u32 %v509, 16
      %v567 = vrot.slane %v565, 5
      %v568 = vor.u32 %v564, %v567
      %v569 = vrot.slane %v568, 4
      %v571 = vshll.u32 %v510, 16
      %v573 = vrot.slane %v571, 5
      %v574 = vsel %vm257, %v569, %v573
      %v576 = vshrl.u32 %v511, 16
      %v578 = vrot.slane %v576, 4
      %v579 = vshll.u32 %v511, 16
      %v581 = vrot.slane %v579, 5
      %v582 = vor.u32 %v578, %v581
      %v583 = vrot.slane %v582, 4
      %v585 = vshll.u32 %v512, 16
      %v587 = vrot.slane %v585, 5
      %v588 = vsel %vm257, %v583, %v587
      %v590 = vshrl.u32 %v513, 16
      %v592 = vrot.slane %v590, 4
      %v593 = vshll.u32 %v513, 16
      %v595 = vrot.slane %v593, 5
      %v596 = vor.u32 %v592, %v595
      %v597 = vrot.slane %v596, 4
      %v599 = vshll.u32 %v514, 16
      %v601 = vrot.slane %v599, 5
      %v602 = vsel %vm257, %v597, %v601
      %v604 = vshrl.u32 %v515, 16
      %v606 = vrot.slane %v604, 4
      %v607 = vshll.u32 %v515, 16
      %v609 = vrot.slane %v607, 5
      %v610 = vor.u32 %v606, %v609
      %v611 = vrot.slane %v610, 4
      %v613 = vshll.u32 %v516, 16
      %v615 = vrot.slane %v613, 5
      %v616 = vsel %vm257, %v611, %v615
      %v618 = vshrl.u32 %v517, 16
      %v620 = vrot.slane %v618, 4
      %v621 = vshll.u32 %v517, 16
      %v623 = vrot.slane %v621, 5
      %v624 = vor.u32 %v620, %v623
      %v625 = vrot.slane %v624, 4
      %v627 = vshll.u32 %v518, 16
      %v629 = vrot.slane %v627, 5
      %v630 = vsel %vm257, %v625, %v629
      %631 = vrot.lane.b32.xlu0 %v532, 20
      %v632 = vpop.permute.xlu0 %631
      %633 = vrot.lane.b32.xlu0 %v546, 20
      %v634 = vpop.permute.xlu0 %633
      %635 = vrot.lane.b32.xlu0 %v560, 20
      %v636 = vpop.permute.xlu0 %635
      %637 = vrot.lane.b32.xlu0 %v574, 20
      %v638 = vpop.permute.xlu0 %637
      %639 = vrot.lane.b32.xlu0 %v588, 20
      %v640 = vpop.permute.xlu0 %639
      %641 = vrot.lane.b32.xlu0 %v602, 20
      %v642 = vpop.permute.xlu0 %641
      %643 = vrot.lane.b32.xlu0 %v616, 20
      %v644 = vpop.permute.xlu0 %643
      %645 = vrot.lane.b32.xlu0 %v630, 20
      %v646 = vpop.permute.xlu0 %645
      %vm655 = vcmask 191648
      %656 = vst.msk [vmem:[#allocation2] sm:$0xf] %vm655, %v632
      %657 = vst.msk [vmem:[#allocation2 + $0x4] sm:$0xf] %vm655, %v634
      %658 = vst.msk [vmem:[#allocation2 + $0x8] sm:$0xf] %vm655, %v636
      %659 = vst.msk [vmem:[#allocation2 + $0xc] sm:$0xf] %vm655, %v638
      %660 = vst.msk [vmem:[#allocation2 + $0x10] sm:$0xf] %vm655, %v640
      %661 = vst.msk [vmem:[#allocation2 + $0x14] sm:$0xf] %vm655, %v642
      %662 = vst.msk [vmem:[#allocation2 + $0x18] sm:$0xf] %vm655, %v644
      %663 = vst.msk [vmem:[#allocation2 + $0x1c] sm:$0xf] %vm655, %v646
      %s664 = scalar_lea.vmem %s165, 8
      %v665 = vld [vmem:[%s664] sm:$0xf]
      %v666 = vld [vmem:[%s664 + $0x8] sm:$0xf]
      %v667 = vld [vmem:[%s664 + $0x10] sm:$0xf]
      %v668 = vld [vmem:[%s664 + $0x18] sm:$0xf]
      %v669 = vld [vmem:[%s664 + $0x20] sm:$0xf]
      %v670 = vld [vmem:[%s664 + $0x28] sm:$0xf]
      %v671 = vld [vmem:[%s664 + $0x30] sm:$0xf]
      %v672 = vld [vmem:[%s664 + $0x38] sm:$0xf]
      %681 = vrot.lane.b32.xlu0 %v665, 24
      %v682 = vpop.permute.xlu0 %681
      %683 = vrot.lane.b32.xlu0 %v666, 24
      %v684 = vpop.permute.xlu0 %683
      %685 = vrot.lane.b32.xlu0 %v667, 24
      %v686 = vpop.permute.xlu0 %685
      %687 = vrot.lane.b32.xlu0 %v668, 24
      %v688 = vpop.permute.xlu0 %687
      %689 = vrot.lane.b32.xlu0 %v669, 24
      %v690 = vpop.permute.xlu0 %689
      %691 = vrot.lane.b32.xlu0 %v670, 24
      %v692 = vpop.permute.xlu0 %691
      %693 = vrot.lane.b32.xlu0 %v671, 24
      %v694 = vpop.permute.xlu0 %693
      %695 = vrot.lane.b32.xlu0 %v672, 24
      %v696 = vpop.permute.xlu0 %695
      %vm705 = vcmask 224448
      %706 = vst.msk [vmem:[#allocation2] sm:$0xf] %vm705, %v682
      %707 = vst.msk [vmem:[#allocation2 + $0x4] sm:$0xf] %vm705, %v684
      %708 = vst.msk [vmem:[#allocation2 + $0x8] sm:$0xf] %vm705, %v686
      %709 = vst.msk [vmem:[#allocation2 + $0xc] sm:$0xf] %vm705, %v688
      %710 = vst.msk [vmem:[#allocation2 + $0x10] sm:$0xf] %vm705, %v690
      %711 = vst.msk [vmem:[#allocation2 + $0x14] sm:$0xf] %vm705, %v692
      %712 = vst.msk [vmem:[#allocation2 + $0x18] sm:$0xf] %vm705, %v694
      %713 = vst.msk [vmem:[#allocation2 + $0x1c] sm:$0xf] %vm705, %v696
      %s714 = scalar_lea.vmem %s165, 80
      %v715 = vld [vmem:[%s714] sm:$0xf]
      %v716 = vld [vmem:[%s714 + $0x8] sm:$0xf]
      %v717 = vld [vmem:[%s714 + $0x10] sm:$0xf]
      %v718 = vld [vmem:[%s714 + $0x18] sm:$0xf]
      %v719 = vld [vmem:[%s714 + $0x20] sm:$0xf]
      %v720 = vld [vmem:[%s714 + $0x28] sm:$0xf]
      %v721 = vld [vmem:[%s714 + $0x30] sm:$0xf]
      %v722 = vld [vmem:[%s714 + $0x38] sm:$0xf]
      %731 = vrot.lane.b32.xlu0 %v715, 28
      %v732 = vpop.permute.xlu0 %731
      %733 = vrot.lane.b32.xlu0 %v716, 28
      %v734 = vpop.permute.xlu0 %733
      %735 = vrot.lane.b32.xlu0 %v717, 28
      %v736 = vpop.permute.xlu0 %735
      %737 = vrot.lane.b32.xlu0 %v718, 28
      %v738 = vpop.permute.xlu0 %737
      %739 = vrot.lane.b32.xlu0 %v719, 28
      %v740 = vpop.permute.xlu0 %739
      %741 = vrot.lane.b32.xlu0 %v720, 28
      %v742 = vpop.permute.xlu0 %741
      %743 = vrot.lane.b32.xlu0 %v721, 28
      %v744 = vpop.permute.xlu0 %743
      %745 = vrot.lane.b32.xlu0 %v722, 28
      %v746 = vpop.permute.xlu0 %745
      %vm755 = vcmask 257248
      %756 = vst.msk [vmem:[#allocation2] sm:$0xf] %vm755, %v732
      %757 = vst.msk [vmem:[#allocation2 + $0x4] sm:$0xf] %vm755, %v734
      %758 = vst.msk [vmem:[#allocation2 + $0x8] sm:$0xf] %vm755, %v736
      %759 = vst.msk [vmem:[#allocation2 + $0xc] sm:$0xf] %vm755, %v738
      %760 = vst.msk [vmem:[#allocation2 + $0x10] sm:$0xf] %vm755, %v740
      %761 = vst.msk [vmem:[#allocation2 + $0x14] sm:$0xf] %vm755, %v742
      %762 = vst.msk [vmem:[#allocation2 + $0x18] sm:$0xf] %vm755, %v744
      %763 = vst.msk [vmem:[#allocation2 + $0x1c] sm:$0xf] %vm755, %v746
      %v764 = vld [vmem:[%s664] sm:$0xf]
      %v765 = vld [vmem:[%s664 + $0x4] sm:$0x1]
      %v766 = vld [vmem:[%s664 + $0x8] sm:$0xf]
      %v767 = vld [vmem:[%s664 + $0xc] sm:$0x1]
      %v768 = vld [vmem:[%s664 + $0x10] sm:$0xf]
      %v769 = vld [vmem:[%s664 + $0x14] sm:$0x1]
      %v770 = vld [vmem:[%s664 + $0x18] sm:$0xf]
      %v771 = vld [vmem:[%s664 + $0x1c] sm:$0x1]
      %v772 = vld [vmem:[%s664 + $0x20] sm:$0xf]
      %v773 = vld [vmem:[%s664 + $0x24] sm:$0x1]
      %v774 = vld [vmem:[%s664 + $0x28] sm:$0xf]
      %v775 = vld [vmem:[%s664 + $0x2c] sm:$0x1]
      %v776 = vld [vmem:[%s664 + $0x30] sm:$0xf]
      %v777 = vld [vmem:[%s664 + $0x34] sm:$0x1]
      %v778 = vld [vmem:[%s664 + $0x38] sm:$0xf]
      %v779 = vld [vmem:[%s664 + $0x3c] sm:$0x1]
      %v781 = vshrl.u32 %v764, 16
      %v783 = vrot.slane %v781, 4
      %v784 = vshll.u32 %v764, 16
      %v786 = vrot.slane %v784, 5
      %v787 = vor.u32 %v783, %v786
      %v788 = vrot.slane %v787, 4
      %v790 = vshll.u32 %v765, 16
      %v792 = vrot.slane %v790, 5
      %v793 = vsel %vm257, %v788, %v792
      %v795 = vshrl.u32 %v766, 16
      %v797 = vrot.slane %v795, 4
      %v798 = vshll.u32 %v766, 16
      %v800 = vrot.slane %v798, 5
      %v801 = vor.u32 %v797, %v800
      %v802 = vrot.slane %v801, 4
      %v804 = vshll.u32 %v767, 16
      %v806 = vrot.slane %v804, 5
      %v807 = vsel %vm257, %v802, %v806
      %v809 = vshrl.u32 %v768, 16
      %v811 = vrot.slane %v809, 4
      %v812 = vshll.u32 %v768, 16
      %v814 = vrot.slane %v812, 5
      %v815 = vor.u32 %v811, %v814
      %v816 = vrot.slane %v815, 4
      %v818 = vshll.u32 %v769, 16
      %v820 = vrot.slane %v818, 5
      %v821 = vsel %vm257, %v816, %v820
      %v823 = vshrl.u32 %v770, 16
      %v825 = vrot.slane %v823, 4
      %v826 = vshll.u32 %v770, 16
      %v828 = vrot.slane %v826, 5
      %v829 = vor.u32 %v825, %v828
      %v830 = vrot.slane %v829, 4
      %v832 = vshll.u32 %v771, 16
      %v834 = vrot.slane %v832, 5
      %v835 = vsel %vm257, %v830, %v834
      %v837 = vshrl.u32 %v772, 16
      %v839 = vrot.slane %v837, 4
      %v840 = vshll.u32 %v772, 16
      %v842 = vrot.slane %v840, 5
      %v843 = vor.u32 %v839, %v842
      %v844 = vrot.slane %v843, 4
      %v846 = vshll.u32 %v773, 16
      %v848 = vrot.slane %v846, 5
      %v849 = vsel %vm257, %v844, %v848
      %v851 = vshrl.u32 %v774, 16
      %v853 = vrot.slane %v851, 4
      %v854 = vshll.u32 %v774, 16
      %v856 = vrot.slane %v854, 5
      %v857 = vor.u32 %v853, %v856
      %v858 = vrot.slane %v857, 4
      %v860 = vshll.u32 %v775, 16
      %v862 = vrot.slane %v860, 5
      %v863 = vsel %vm257, %v858, %v862
      %v865 = vshrl.u32 %v776, 16
      %v867 = vrot.slane %v865, 4
      %v868 = vshll.u32 %v776, 16
      %v870 = vrot.slane %v868, 5
      %v871 = vor.u32 %v867, %v870
      %v872 = vrot.slane %v871, 4
      %v874 = vshll.u32 %v777, 16
      %v876 = vrot.slane %v874, 5
      %v877 = vsel %vm257, %v872, %v876
      %v879 = vshrl.u32 %v778, 16
      %v881 = vrot.slane %v879, 4
      %v882 = vshll.u32 %v778, 16
      %v884 = vrot.slane %v882, 5
      %v885 = vor.u32 %v881, %v884
      %v886 = vrot.slane %v885, 4
      %v888 = vshll.u32 %v779, 16
      %v890 = vrot.slane %v888, 5
      %v891 = vsel %vm257, %v886, %v890
      %892 = vrot.lane.b32.xlu0 %v793, 32
      %v893 = vpop.permute.xlu0 %892
      %894 = vrot.lane.b32.xlu0 %v807, 32
      %v895 = vpop.permute.xlu0 %894
      %896 = vrot.lane.b32.xlu0 %v821, 32
      %v897 = vpop.permute.xlu0 %896
      %898 = vrot.lane.b32.xlu0 %v835, 32
      %v899 = vpop.permute.xlu0 %898
      %900 = vrot.lane.b32.xlu0 %v849, 32
      %v901 = vpop.permute.xlu0 %900
      %902 = vrot.lane.b32.xlu0 %v863, 32
      %v903 = vpop.permute.xlu0 %902
      %904 = vrot.lane.b32.xlu0 %v877, 32
      %v905 = vpop.permute.xlu0 %904
      %906 = vrot.lane.b32.xlu0 %v891, 32
      %v907 = vpop.permute.xlu0 %906
      %vm916 = vcmask 290048
      %917 = vst.msk [vmem:[#allocation2] sm:$0xf] %vm916, %v893
      %918 = vst.msk [vmem:[#allocation2 + $0x4] sm:$0xf] %vm916, %v895
      %919 = vst.msk [vmem:[#allocation2 + $0x8] sm:$0xf] %vm916, %v897
      %920 = vst.msk [vmem:[#allocation2 + $0xc] sm:$0xf] %vm916, %v899
      %921 = vst.msk [vmem:[#allocation2 + $0x10] sm:$0xf] %vm916, %v901
      %922 = vst.msk [vmem:[#allocation2 + $0x14] sm:$0xf] %vm916, %v903
      %923 = vst.msk [vmem:[#allocation2 + $0x18] sm:$0xf] %vm916, %v905
      %924 = vst.msk [vmem:[#allocation2 + $0x1c] sm:$0xf] %vm916, %v907
      %v925 = vld [vmem:[#allocation2] sm:$0xf]
      %v926 = vld [vmem:[#allocation2 + $0x4] sm:$0xf]
      %v927 = vld [vmem:[#allocation2 + $0x8] sm:$0xf]
      %v928 = vld [vmem:[#allocation2 + $0xc] sm:$0xf]
      %v929 = vld [vmem:[#allocation2 + $0x10] sm:$0xf]
      %v930 = vld [vmem:[#allocation2 + $0x14] sm:$0xf]
      %v931 = vld [vmem:[#allocation2 + $0x18] sm:$0xf]
      %v932 = vld [vmem:[#allocation2 + $0x1c] sm:$0xf]
      %v933 = vld [vmem:[%s1] sm:$0xf]
      %v934 = vld [vmem:[%s1 + $0x4] sm:$0xf]
      %v935 = vld [vmem:[%s1 + $0x8] sm:$0xf]
      %v936 = vld [vmem:[%s1 + $0xc] sm:$0xf]
      %v937 = vld [vmem:[%s1 + $0x10] sm:$0x3]
      %v938 = vld [vmem:[%s2] sm:$0x1]
      %v940 = vlaneseq
      %v941 = vshrl.u32 %v940, 7
      %v942 = vsub.s32 0, %v941
      %v943 = vrot.slane %v938, %v942
      %v953 = vunpack.c.l.b16 %v925
      %v954 = vunpack.c.l.b16 %v926
      %v955 = vunpack.c.l.b16 %v927
      %v956 = vunpack.c.l.b16 %v928
      %v957 = vunpack.c.l.b16 %v929
      %v958 = vunpack.c.l.b16 %v930
      %v959 = vunpack.c.l.b16 %v931
      %v960 = vunpack.c.l.b16 %v932
      %v961 = vpack.c.b16 %v954, %v953
      %v962 = vpack.c.b16 %v956, %v955
      %v963 = vpack.c.b16 %v958, %v957
      %v964 = vpack.c.b16 %v960, %v959
      %v970 = vunpack.c.l.b16 %v933
      %v971 = vunpack.c.l.b16 %v934
      %v972 = vunpack.c.l.b16 %v935
      %v973 = vunpack.c.l.b16 %v936
      %v974 = vunpack.c.l.b16 %v937
      %v975 = vpack.c.b16 %v971, %v970
      %v976 = vpack.c.b16 %v973, %v972
      %v977 = vpack.c.b16 %v974, %v974
      %vm980 = vcmask 293888
      %v982 = vsel %vm980, %v961, 0
      %v985 = vsel %vm980, %v962, 0
      %v988 = vsel %vm980, %v963, 0
      %v991 = vsel %vm980, %v964, 0
      %vm993 = vcmask 1041408
      %v995 = vsel %vm993, %v977, 0
      %997 = vmatprep.subr.bf16.mxu0 0
      %998 = vmatpush1.bf16.msra.mxu0 %v975
      %999 = vmatprep.subr.bf16.mxu0 0
      %1000 = vmatpush1.bf16.msra.mxu0 %v976
      %1001 = vmatprep.subr.bf16.mxu0 0
      %1002 = vmatpush1.bf16.msra.mxu0 %v995
      %1003 = vmatprep.subr.bf16.mxu0 0
      %1004 = vmatpush1.bf16.msra.mxu0 0
      %1005 = vmatprep.subr.bf16.mxu0 0
      %1006 = vmatpush1.bf16.msra.mxu0 0
      %1007 = vmatprep.subr.bf16.mxu0 0
      %1008 = vmatpush1.bf16.msra.mxu0 0
      %1009 = vmatprep.subr.bf16.mxu0 0
      %1010 = vmatpush1.bf16.msra.mxu0 0
      %1011 = vmatprep.subr.bf16.mxu0 0
      %1012 = vmatpush1.bf16.msra.mxu0 0
      %1013 = vmatprep.subr.bf16.mxu0 0
      %1014 = vmatpush1.bf16.msra.mxu0 0
      %1015 = vmatprep.subr.bf16.mxu0 0
      %1016 = vmatpush1.bf16.msra.mxu0 0
      %1017 = vmatprep.subr.bf16.mxu0 0
      %1018 = vmatpush1.bf16.msra.mxu0 0
      %1019 = vmatprep.subr.bf16.mxu0 0
      %1020 = vmatpush1.bf16.msra.mxu0 0
      %1021 = vmatprep.subr.bf16.mxu0 0
      %1022 = vmatpush1.bf16.msra.mxu0 0
      %1023 = vmatprep.subr.bf16.mxu0 0
      %1024 = vmatpush1.bf16.msra.mxu0 0
      %1025 = vmatprep.subr.bf16.mxu0 0
      %1026 = vmatpush1.bf16.msra.mxu0 0
      %1027 = vmatprep.subr.bf16.mxu0 0
      %1028 = vmatpush1.bf16.msra.mxu0 0
      %1029 = vmatprep.mubr.bf16.mxu0 0
      %1030 = vmatmul.mubr.bf16.gmra.mrb[0].mxu0 %v982
      %v1031 = vpop.f32.mrb[0].mxu0
      %v1032 = vadd.f32 %v943, %v1031
      %v1033 = vpop.f32.mrb[0].mxu0
      %v1034 = vpop.f32.mrb[0].mxu0
      %v1035 = vadd.f32 %v943, %v1034
      %v1036 = vpop.f32.mrb[0].mxu0
      %1037 = vmatprep.mubr.bf16.mxu0 0
      %1038 = vmatmul.mubr.bf16.gmra.mrb[0].mxu0 %v985
      %v1039 = vpop.f32.mrb[0].mxu0
      %v1040 = vadd.f32 %v943, %v1039
      %v1041 = vpop.f32.mrb[0].mxu0
      %v1042 = vpop.f32.mrb[0].mxu0
      %v1043 = vadd.f32 %v943, %v1042
      %v1044 = vpop.f32.mrb[0].mxu0
      %1045 = vmatprep.mubr.bf16.mxu0 0
      %1046 = vmatmul.mubr.bf16.gmra.mrb[0].mxu0 %v988
      %v1047 = vpop.f32.mrb[0].mxu0
      %v1048 = vadd.f32 %v943, %v1047
      %v1049 = vpop.f32.mrb[0].mxu0
      %v1050 = vpop.f32.mrb[0].mxu0
      %v1051 = vadd.f32 %v943, %v1050
      %v1052 = vpop.f32.mrb[0].mxu0
      %1053 = vmatprep.mubr.bf16.mxu0 0
      %1054 = vmatmul.mubr.bf16.gmra.mrb[0].mxu0 %v991
      %v1055 = vpop.f32.mrb[0].mxu0
      %v1056 = vadd.f32 %v943, %v1055
      %v1057 = vpop.f32.mrb[0].mxu0
      %v1058 = vpop.f32.mrb[0].mxu0
      %v1059 = vadd.f32 %v943, %v1058
      %v1060 = vpop.f32.mrb[0].mxu0
      %1061 = vdwg.mxu0
      %v1062 = vmax.f32 %v1032, 0.0
      %v1063 = vmax.f32 %v1035, 0.0
      %v1064 = vmax.f32 %v1040, 0.0
      %v1065 = vmax.f32 %v1043, 0.0
      %v1066 = vmax.f32 %v1048, 0.0
      %v1067 = vmax.f32 %v1051, 0.0
      %v1068 = vmax.f32 %v1056, 0.0
      %v1069 = vmax.f32 %v1059, 0.0
      %v1070 = vpack.c.bf16 %v1062, %v1062
      %v1071 = vpack.c.bf16 %v1063, %v1063
      %v1072 = vpack.c.bf16 %v1064, %v1064
      %v1073 = vpack.c.bf16 %v1065, %v1065
      %v1074 = vpack.c.bf16 %v1066, %v1066
      %v1075 = vpack.c.bf16 %v1067, %v1067
      %v1076 = vpack.c.bf16 %v1068, %v1068
      %v1077 = vpack.c.bf16 %v1069, %v1069
      %vm1078 = vcmask 60416
      %1079 = vst.msk [vmem:[%s170] sm:$0xf] %vm1078, %v1070
      %1080 = vst.msk [vmem:[%s170 + $0x4] sm:$0xf] %vm1078, %v1071
      %1081 = vst.msk [vmem:[%s170 + $0x8] sm:$0xf] %vm1078, %v1072
      %1082 = vst.msk [vmem:[%s170 + $0xc] sm:$0xf] %vm1078, %v1073
      %1083 = vst.msk [vmem:[%s170 + $0x10] sm:$0xf] %vm1078, %v1074
      %1084 = vst.msk [vmem:[%s170 + $0x14] sm:$0xf] %vm1078, %v1075
      %1085 = vst.msk [vmem:[%s170 + $0x18] sm:$0xf] %vm1078, %v1076
      %1086 = vst.msk [vmem:[%s170 + $0x1c] sm:$0xf] %vm1078, %v1077
      %p1087 = scmp.lt.s32.totalorder %s14, 1
      %s1088 = scalar_select %p1087, %s14, 1
      %s1089 = smul.addr %s1088, 8
      %s1090 = smul.addr %s1089, 4
      %s1091 = scalar_lea.vmem %s3, %s1090
      // Predicated region
      $region33: #{basic_block_forward.2} parent=31 // pred_check
        %p1092 = pneg %p100
      $region34: #{basic_block_forward.2} parent=31 // pred_check_branch
        %1094 = sbr.rel (%p1092) target = $region36
      $region35: #{basic_block_forward.2} parent=31 // pred_region
        _
      $region36: #{basic_block_forward.2} parent=31 // pred_fallthru
        _
    $region32: #{basic_block_forward.2} parent=5 // pred_fallthru
      _
    %p1095 = scmp.le.s32.totalorder 2, %s9
    // Predicated region
    $region37: #{basic_block_forward.2} parent=5 // pred_check
      %p1096 = pneg %p1095
    $region38: #{basic_block_forward.2} parent=5 // pred_check_branch
      %1098 = sbr.rel (%p1096) target = $region40
    $region39: #{basic_block_forward.2} parent=5 // pred_region
      %s1099 = ssub.s32 %s9, 2
      // Predicated region
      $region41: #{basic_block_forward.2} parent=39 // pred_check
        %p1100 = pneg %p106
      $region42: #{basic_block_forward.2} parent=39 // pred_check_branch
        %1102 = sbr.rel (%p1100) target = $region44
      $region43: #{basic_block_forward.2} parent=39 // pred_region
        %p1103 = scmp.lt.s32.totalorder %s15, 1
        %s1104 = scalar_select %p1103, %s15, 1
        %s1105 = smul.addr %s1104, 8
        %s1106 = smul.addr %s1105, 4
        %s1107 = scalar_lea.vmem %s3, %s1106
      $region44: #{basic_block_forward.2} parent=39 // pred_fallthru
        _
    $region40: #{basic_block_forward.2} parent=5 // pred_fallthru
      _
  $region6: #{basic_block_forward.2} parent=0 // loop_footer
    %s13 = sadd.s32 1, %s9
  $region7: #{basic_block_forward.2} parent=0 // loop_footer_branch
    %8 = sbr.rel target = $region3
  $region8: #{basic_block_forward.2} parent=0 // loop_exit
    _

// kernel: basic_block_forward.3
$region0: #{basic_block_forward.3}
  #allocation0 [shape = 'u32[]', space=smem, size = 0x4, offset = 0x4, fixed_abs, tag = 'smem constant byte address 0x4 - core index']
  #allocation1 [shape = 'u32[144,128]{1,0:T(1,128)}', space=vmem, size = 0x12000, scoped, tag = 'internal scratch']
  #allocation2 [shape = 'bf16[1,10,10,8]{3,2,1,0:T(8,128)(2,1)}', space=vmem, size = 0xa000, scoped, tag = 'scratch operand']
  #allocation3 [shape = 'bf16[1,8,8,76]{3,2,1,0:T(8,128)(2,1)}', space=vmem, size = 0x4000, scoped, tag = 'scratch operand']
  %s0 = inlined_call_operand.vmem [shape: bf16[2,8,8,8], index: 0, kind: input, shape index: {}]
  %s1 = inlined_call_operand.vmem [shape: bf16[2,8,8,4], index: 1, kind: input, shape index: {}]
  %s2 = inlined_call_operand.vmem [shape: bf16[76,8], index: 2, kind: input, shape index: {}]
  %s3 = inlined_call_operand.vmem [shape: f32[1,8], index: 3, kind: input, shape index: {}]
  %s4 = inlined_call_operand.vmem [shape: f32[2,8,8,8], index: 4, kind: output, shape index: {}]
  %s5 = sld [smem:[#allocation0]]
  $region49: #{basic_block_forward.3} parent=0
    _
  %s7 = ssub.s32 1, %s5
  %s8 = scalar_select 0, %s7, %s5
  loop: start=0, step=1, limit=4
  $region2: #{basic_block_forward.3} parent=0 // loop_pre_header
    _
  $region3: #{basic_block_forward.3} parent=0 // loop_header
    %s10 = sphi 0, %s14
    %p11 = scmp.ge.s32.totalorder %s10, 4
    %s20 = sphi 0, %s22
    %s23 = sphi 0, %s20
    %s24 = sphi 0, %s23
    %s40 = sphi 0, %s24
    %s46 = sphi 0, %s48
    %s49 = sphi 0, %s46
    %s50 = sphi 0, %s49
    %s66 = sphi 0, %s50
    %s70 = sphi 0, %s70
    %s72 = sphi 0, %s70
    %s73 = sphi 0, %s72
    %s87 = sphi 0, %s73
    %s91 = sphi 0, %s91
    %s93 = sphi 0, %s91
    %s94 = sphi 0, %s93
    %s108 = sphi 0, %s94
    %s114 = sphi 0, %s116
    %s117 = sphi 0, %s114
    %s118 = sphi 0, %s117
    %s134 = sphi 0, %s118
  $region4: #{basic_block_forward.3} parent=0 // loop_header_branch
    %13 = sbr.rel (%p11) target = $region8
  $region5: #{basic_block_forward.3} parent=0 // loop_body
    %s15 = ssub.s32 %s10, 1
    %s16 = ssub.s32 %s10, 2
    %s17 = sadd.s32 %s10, 1
    %s18 = ssub.s32 %s10, %s17
    %p19 = scmp.eq.s32.totalorder %s18, 0
    %s21 = sadd.s32 %s20, 1
    %s22 = scalar_select %p19, %s20, %s21
    %p25 = pneg %p19
    %p26 = scmp.eq.s32.totalorder %s10, 1
    %p27 = por %p25, %p26
    %p28 = scmp.ne.s32.totalorder %s20, %s23
    %p29 = scmp.eq.s32.totalorder %s10, 0
    %p30 = por %p28, %p29
    %p31 = scmp.ne.s32.totalorder %s20, %s23
    %p32 = scmp.eq.s32.totalorder %s15, 1
    %p33 = por %p31, %p32
    %p34 = scmp.ne.s32.totalorder %s23, %s24
    %p35 = scmp.eq.s32.totalorder %s15, 0
    %p36 = por %p34, %p35
    %p37 = scmp.ne.s32.totalorder %s23, %s24
    %p38 = scmp.eq.s32.totalorder %s16, 1
    %p39 = por %p37, %p38
    %p41 = scmp.ne.s32.totalorder %s24, %s40
    %p42 = scmp.eq.s32.totalorder %s16, 0
    %p43 = por %p41, %p42
    %s44 = ssub.s32 %s10, %s17
    %p45 = scmp.eq.s32.totalorder %s44, 0
    %s47 = sadd.s32 %s46, 1
    %s48 = scalar_select %p45, %s46, %s47
    %p51 = pneg %p45
    %p52 = scmp.eq.s32.totalorder %s10, 1
    %p53 = por %p51, %p52
    %p54 = scmp.ne.s32.totalorder %s46, %s49
    %p55 = scmp.eq.s32.totalorder %s10, 0
    %p56 = por %p54, %p55
    %p57 = scmp.ne.s32.totalorder %s46, %s49
    %p58 = scmp.eq.s32.totalorder %s15, 1
    %p59 = por %p57, %p58
    %p60 = scmp.ne.s32.totalorder %s49, %s50
    %p61 = scmp.eq.s32.totalorder %s15, 0
    %p62 = por %p60, %p61
    %p63 = scmp.ne.s32.totalorder %s49, %s50
    %p64 = scmp.eq.s32.totalorder %s16, 1
    %p65 = por %p63, %p64
    %p67 = scmp.ne.s32.totalorder %s50, %s66
    %p68 = scmp.eq.s32.totalorder %s16, 0
    %p69 = por %p67, %p68
    %s71 = sadd.s32 %s70, 1
    %p74 = scmp.eq.s32.totalorder %s10, 1
    %p75 = scmp.ne.s32.totalorder %s70, %s72
    %p76 = scmp.eq.s32.totalorder %s10, 0
    %p77 = por %p75, %p76
    %p78 = scmp.ne.s32.totalorder %s70, %s72
    %p79 = scmp.eq.s32.totalorder %s15, 1
    %p80 = por %p78, %p79
    %p81 = scmp.ne.s32.totalorder %s72, %s73
    %p82 = scmp.eq.s32.totalorder %s15, 0
    %p83 = por %p81, %p82
    %p84 = scmp.ne.s32.totalorder %s72, %s73
    %p85 = scmp.eq.s32.totalorder %s16, 1
    %p86 = por %p84, %p85
    %p88 = scmp.ne.s32.totalorder %s73, %s87
    %p89 = scmp.eq.s32.totalorder %s16, 0
    %p90 = por %p88, %p89
    %s92 = sadd.s32 %s91, 1
    %p95 = scmp.eq.s32.totalorder %s10, 1
    %p96 = scmp.ne.s32.totalorder %s91, %s93
    %p97 = scmp.eq.s32.totalorder %s10, 0
    %p98 = por %p96, %p97
    %p99 = scmp.ne.s32.totalorder %s91, %s93
    %p100 = scmp.eq.s32.totalorder %s15, 1
    %p101 = por %p99, %p100
    %p102 = scmp.ne.s32.totalorder %s93, %s94
    %p103 = scmp.eq.s32.totalorder %s15, 0
    %p104 = por %p102, %p103
    %p105 = scmp.ne.s32.totalorder %s93, %s94
    %p106 = scmp.eq.s32.totalorder %s16, 1
    %p107 = por %p105, %p106
    %p109 = scmp.ne.s32.totalorder %s94, %s108
    %p110 = scmp.eq.s32.totalorder %s16, 0
    %p111 = por %p109, %p110
    %s112 = ssub.s32 %s10, %s17
    %p113 = scmp.eq.s32.totalorder %s112, 0
    %s115 = sadd.s32 %s114, 1
    %s116 = scalar_select %p113, %s114, %s115
    %p119 = pneg %p113
    %p120 = scmp.eq.s32.totalorder %s10, 1
    %p121 = por %p119, %p120
    %p122 = scmp.ne.s32.totalorder %s114, %s117
    %p123 = scmp.eq.s32.totalorder %s10, 0
    %p124 = por %p122, %p123
    %p125 = scmp.ne.s32.totalorder %s114, %s117
    %p126 = scmp.eq.s32.totalorder %s15, 1
    %p127 = por %p125, %p126
    %p128 = scmp.ne.s32.totalorder %s117, %s118
    %p129 = scmp.eq.s32.totalorder %s15, 0
    %p130 = por %p128, %p129
    %p131 = scmp.ne.s32.totalorder %s117, %s118
    %p132 = scmp.eq.s32.totalorder %s16, 1
    %p133 = por %p131, %p132
    %p135 = scmp.ne.s32.totalorder %s118, %s134
    %p136 = scmp.eq.s32.totalorder %s16, 0
    %p137 = por %p135, %p136
    %p138 = scmp.le.s32.totalorder 1, %s10
    %p139 = scmp.lt.s32.totalorder %s10, 3
    %p140 = pnand %p138, %p139
    %p141 = pneg %p140
    // Predicated region
    $region9: #{basic_block_forward.3} parent=5 // pred_check
      _
    $region10: #{basic_block_forward.3} parent=5 // pred_check_branch
      %143 = sbr.rel (%p140) target = $region12
    $region11: #{basic_block_forward.3} parent=5 // pred_region
      %s144 = ssub.s32 %s10, 1
      // Predicated region
      $region13: #{basic_block_forward.3} parent=11 // pred_check
        %p145 = pneg %p83
      $region14: #{basic_block_forward.3} parent=11 // pred_check_branch
        %147 = sbr.rel (%p145) target = $region16
      $region15: #{basic_block_forward.3} parent=11 // pred_region
        _
      $region16: #{basic_block_forward.3} parent=11 // pred_fallthru
        _
      // Predicated region
      $region17: #{basic_block_forward.3} parent=11 // pred_check
        %p148 = pneg %p104
      $region18: #{basic_block_forward.3} parent=11 // pred_check_branch
        %150 = sbr.rel (%p148) target = $region20
      $region19: #{basic_block_forward.3} parent=11 // pred_region
        _
      $region20: #{basic_block_forward.3} parent=11 // pred_fallthru
        _
    $region12: #{basic_block_forward.3} parent=5 // pred_fallthru
      _
    %p151 = scmp.lt.s32.totalorder %s10, 2
    // Predicated region
    $region21: #{basic_block_forward.3} parent=5 // pred_check
      %p152 = pneg %p151
    $region22: #{basic_block_forward.3} parent=5 // pred_check_branch
      %154 = sbr.rel (%p152) target = $region24
    $region23: #{basic_block_forward.3} parent=5 // pred_region
      // Predicated region
      $region25: #{basic_block_forward.3} parent=23 // pred_check
        %p155 = pneg %p30
      $region26: #{basic_block_forward.3} parent=23 // pred_check_branch
        %157 = sbr.rel (%p155) target = $region28
      $region27: #{basic_block_forward.3} parent=23 // pred_region
        %p158 = scmp.lt.s32.totalorder %s10, 1
        %s159 = scalar_select %p158, %s10, 1
        %s160 = smul.addr %s159, 8
        %s161 = smul.addr %s160, 4
        %s162 = scalar_lea.vmem %s0, %s161
      $region28: #{basic_block_forward.3} parent=23 // pred_fallthru
        _
      // Predicated region
      $region29: #{basic_block_forward.3} parent=23 // pred_check
        %p163 = pneg %p56
      $region30: #{basic_block_forward.3} parent=23 // pred_check_branch
        %165 = sbr.rel (%p163) target = $region32
      $region31: #{basic_block_forward.3} parent=23 // pred_region
        %p166 = scmp.lt.s32.totalorder %s10, 1
        %s167 = scalar_select %p166, %s10, 1
        %s168 = smul.addr %s167, 8
        %s169 = smul.addr %s168, 4
        %s170 = scalar_lea.vmem %s1, %s169
      $region32: #{basic_block_forward.3} parent=23 // pred_fallthru
        _
    $region24: #{basic_block_forward.3} parent=5 // pred_fallthru
      _
    %p171 = scmp.le.s32.totalorder 1, %s10
    %p172 = scmp.lt.s32.totalorder %s10, 3
    %p173 = pnand %p171, %p172
    %p174 = pneg %p173
    // Predicated region
    $region33: #{basic_block_forward.3} parent=5 // pred_check
      _
    $region34: #{basic_block_forward.3} parent=5 // pred_check_branch
      %176 = sbr.rel (%p173) target = $region36
    $region35: #{basic_block_forward.3} parent=5 // pred_region
      %s177 = ssub.s32 %s10, 1
      %p178 = scmp.lt.s32.totalorder %s15, 1
      %s179 = scalar_select %p178, %s15, 1
      %s180 = smul.addr %s179, 8
      %s181 = smul.addr %s180, 4
      %s182 = scalar_lea.vmem %s0, %s181
      %p183 = pneg %p36
      %p184 = pneg %p33
      %p185 = scmp.lt.s32.totalorder %s15, 1
      %s186 = scalar_select %p185, %s15, 1
      %s187 = smul.addr %s186, 8
      %s188 = smul.addr %s187, 4
      %s189 = scalar_lea.vmem %s1, %s188
      %p190 = pneg %p62
      %p191 = pneg %p59
      %p192 = pneg %p83
      %p193 = pneg %p80
      %p194 = pneg %p104
      %p195 = pneg %p101
      %p196 = pneg %p130
      %p197 = pneg %p127
      %p198 = scmp.lt.s32.totalorder %s15, 1
      %s199 = scalar_select %p198, %s15, 1
      %s200 = smul.addr %s199, 8
      %s201 = smul.addr %s200, 8
      %s202 = scalar_lea.vmem %s4, %s201
      %p203 = scmp.lt.s32.totalorder %s15, 1
      %s204 = scalar_select %p203, %s15, 1
      %s205 = smul.addr %s204, 8
      %s206 = smul.addr %s205, 4
      %s207 = scalar_lea.vmem %s0, %s206
      %p208 = scmp.lt.s32.totalorder %s15, 1
      %s209 = scalar_select %p208, %s15, 1
      %s210 = smul.addr %s209, 8
      %s211 = smul.addr %s210, 4
      %s212 = scalar_lea.vmem %s1, %s211
      %p213 = scmp.lt.s32.totalorder %s15, 1
      %s214 = scalar_select %p213, %s15, 1
      %s215 = smul.addr %s214, 8
      %s216 = smul.addr %s215, 8
      %s217 = scalar_lea.vmem %s4, %s216
      %vm219 = vcmask 60416
      %220 = vst.msk [vmem:[#allocation2] sm:$0xf] %vm219, 0
      %vm221 = vcmask 57344
      %222 = vst.msk [vmem:[#allocation2 + $0x4] sm:$0x1] %vm221, 0
      %s223 = scalar_lea.vmem [#allocation2], 72
      %224 = vst.msk [vmem:[%s223] sm:$0xf] %vm219, 0
      %225 = vst.msk [vmem:[%s223 + $0x4] sm:$0x1] %vm221, 0
      %vm226 = vcmask 57344
      %vm227 = vsmask.f32 256
      %vm228 = vmand %vm226, %vm227
      %v229 = vld [vmem:[#allocation2] sm:$0x1]
      %v230 = vsel %vm228, 0, %v229
      %231 = vst [vmem:[#allocation2] sm:$0x1] %v230
      %v232 = vld [vmem:[#allocation2 + $0x8] sm:$0x1]
      %v233 = vsel %vm228, 0, %v232
      %234 = vst [vmem:[#allocation2 + $0x8] sm:$0x1] %v233
      %v235 = vld [vmem:[#allocation2 + $0x10] sm:$0x1]
      %v236 = vsel %vm228, 0, %v235
      %237 = vst [vmem:[#allocation2 + $0x10] sm:$0x1] %v236
      %v238 = vld [vmem:[#allocation2 + $0x18] sm:$0x1]
      %v239 = vsel %vm228, 0, %v238
      %240 = vst [vmem:[#allocation2 + $0x18] sm:$0x1] %v239
      %v241 = vld [vmem:[#allocation2 + $0x20] sm:$0x1]
      %v242 = vsel %vm228, 0, %v241
      %243 = vst [vmem:[#allocation2 + $0x20] sm:$0x1] %v242
      %v244 = vld [vmem:[#allocation2 + $0x28] sm:$0x1]
      %v245 = vsel %vm228, 0, %v244
      %246 = vst [vmem:[#allocation2 + $0x28] sm:$0x1] %v245
      %v247 = vld [vmem:[#allocation2 + $0x30] sm:$0x1]
      %v248 = vsel %vm228, 0, %v247
      %249 = vst [vmem:[#allocation2 + $0x30] sm:$0x1] %v248
      %v250 = vld [vmem:[#allocation2 + $0x38] sm:$0x1]
      %v251 = vsel %vm228, 0, %v250
      %252 = vst [vmem:[#allocation2 + $0x38] sm:$0x1] %v251
      %v253 = vld [vmem:[#allocation2 + $0x40] sm:$0x1]
      %v254 = vsel %vm228, 0, %v253
      %255 = vst [vmem:[#allocation2 + $0x40] sm:$0x1] %v254
      %v256 = vld [vmem:[#allocation2 + $0x48] sm:$0x1]
      %v257 = vsel %vm228, 0, %v256
      %258 = vst [vmem:[#allocation2 + $0x48] sm:$0x1] %v257
      %vm259 = vsmask.f32 7938
      %vm260 = vmand %vm226, %vm259
      %v261 = vld [vmem:[#allocation2 + $0x4] sm:$0x1]
      %v262 = vsel %vm260, 0, %v261
      %263 = vst [vmem:[#allocation2 + $0x4] sm:$0x1] %v262
      %v264 = vld [vmem:[#allocation2 + $0xc] sm:$0x1]
      %v265 = vsel %vm260, 0, %v264
      %266 = vst [vmem:[#allocation2 + $0xc] sm:$0x1] %v265
      %v267 = vld [vmem:[#allocation2 + $0x14] sm:$0x1]
      %v268 = vsel %vm260, 0, %v267
      %269 = vst [vmem:[#allocation2 + $0x14] sm:$0x1] %v268
      %v270 = vld [vmem:[#allocation2 + $0x1c] sm:$0x1]
      %v271 = vsel %vm260, 0, %v270
      %272 = vst [vmem:[#allocation2 + $0x1c] sm:$0x1] %v271
      %v273 = vld [vmem:[#allocation2 + $0x24] sm:$0x1]
      %v274 = vsel %vm260, 0, %v273
      %275 = vst [vmem:[#allocation2 + $0x24] sm:$0x1] %v274
      %v276 = vld [vmem:[#allocation2 + $0x2c] sm:$0x1]
      %v277 = vsel %vm260, 0, %v276
      %278 = vst [vmem:[#allocation2 + $0x2c] sm:$0x1] %v277
      %v279 = vld [vmem:[#allocation2 + $0x34] sm:$0x1]
      %v280 = vsel %vm260, 0, %v279
      %281 = vst [vmem:[#allocation2 + $0x34] sm:$0x1] %v280
      %v282 = vld [vmem:[#allocation2 + $0x3c] sm:$0x1]
      %v283 = vsel %vm260, 0, %v282
      %284 = vst [vmem:[#allocation2 + $0x3c] sm:$0x1] %v283
      %v285 = vld [vmem:[#allocation2 + $0x44] sm:$0x1]
      %v286 = vsel %vm260, 0, %v285
      %287 = vst [vmem:[#allocation2 + $0x44] sm:$0x1] %v286
      %v288 = vld [vmem:[#allocation2 + $0x4c] sm:$0x1]
      %v289 = vsel %vm260, 0, %v288
      %290 = vst [vmem:[#allocation2 + $0x4c] sm:$0x1] %v289
      %v291 = vld [vmem:[%s207] sm:$0xf]
      %v292 = vld [vmem:[%s207 + $0x4] sm:$0xf]
      %v293 = vld [vmem:[%s207 + $0x8] sm:$0xf]
      %v294 = vld [vmem:[%s207 + $0xc] sm:$0xf]
      %v295 = vld [vmem:[%s207 + $0x10] sm:$0xf]
      %v296 = vld [vmem:[%s207 + $0x14] sm:$0xf]
      %v297 = vld [vmem:[%s207 + $0x18] sm:$0xf]
      %v298 = vld [vmem:[%s207 + $0x1c] sm:$0xf]
      %v300 = vshrl.u32 %v291, 16
      %v302 = vrot.slane %v300, 7
      %v303 = vshll.u32 %v291, 16
      %v305 = vor.u32 %v302, %v303
      %v306 = vrot.slane %v302, 4
      %v308 = vshrl.u32 %v292, 16
      %v310 = vrot.slane %v308, 7
      %v311 = vshll.u32 %v292, 16
      %v313 = vor.u32 %v310, %v311
      %v314 = vrot.slane %v310, 4
      %v316 = vshrl.u32 %v293, 16
      %v318 = vrot.slane %v316, 7
      %v319 = vshll.u32 %v293, 16
      %v321 = vor.u32 %v318, %v319
      %v322 = vrot.slane %v318, 4
      %v324 = vshrl.u32 %v294, 16
      %v326 = vrot.slane %v324, 7
      %v327 = vshll.u32 %v294, 16
      %v329 = vor.u32 %v326, %v327
      %v330 = vrot.slane %v326, 4
      %v332 = vshrl.u32 %v295, 16
      %v334 = vrot.slane %v332, 7
      %v335 = vshll.u32 %v295, 16
      %v337 = vor.u32 %v334, %v335
      %v338 = vrot.slane %v334, 4
      %v340 = vshrl.u32 %v296, 16
      %v342 = vrot.slane %v340, 7
      %v343 = vshll.u32 %v296, 16
      %v345 = vor.u32 %v342, %v343
      %v346 = vrot.slane %v342, 4
      %v348 = vshrl.u32 %v297, 16
      %v350 = vrot.slane %v348, 7
      %v351 = vshll.u32 %v297, 16
      %v353 = vor.u32 %v350, %v351
      %v354 = vrot.slane %v350, 4
      %v356 = vshrl.u32 %v298, 16
      %v358 = vrot.slane %v356, 7
      %v359 = vshll.u32 %v298, 16
      %v361 = vor.u32 %v358, %v359
      %v362 = vrot.slane %v358, 4
      %s379 = scalar_lea.vmem [#allocation2], 8
      %vm380 = vcmask 60416
      %vm381 = vmand %vm380, %vm259
      %v382 = vld [vmem:[%s379] sm:$0xf]
      %v383 = vsel %vm381, %v305, %v382
      %384 = vst [vmem:[%s379] sm:$0xf] %v383
      %v385 = vld [vmem:[%s379 + $0x4] sm:$0x1]
      %v386 = vsel %vm228, %v306, %v385
      %387 = vst [vmem:[%s379 + $0x4] sm:$0x1] %v386
      %v388 = vld [vmem:[%s379 + $0x8] sm:$0xf]
      %v389 = vsel %vm381, %v313, %v388
      %390 = vst [vmem:[%s379 + $0x8] sm:$0xf] %v389
      %v391 = vld [vmem:[%s379 + $0xc] sm:$0x1]
      %v392 = vsel %vm228, %v314, %v391
      %393 = vst [vmem:[%s379 + $0xc] sm:$0x1] %v392
      %v394 = vld [vmem:[%s379 + $0x10] sm:$0xf]
      %v395 = vsel %vm381, %v321, %v394
      %396 = vst [vmem:[%s379 + $0x10] sm:$0xf] %v395
      %v397 = vld [vmem:[%s379 + $0x14] sm:$0x1]
      %v398 = vsel %vm228, %v322, %v397
      %399 = vst [vmem:[%s379 + $0x14] sm:$0x1] %v398
      %v400 = vld [vmem:[%s379 + $0x18] sm:$0xf]
      %v401 = vsel %vm381, %v329, %v400
      %402 = vst [vmem:[%s379 + $0x18] sm:$0xf] %v401
      %v403 = vld [vmem:[%s379 + $0x1c] sm:$0x1]
      %v404 = vsel %vm228, %v330, %v403
      %405 = vst [vmem:[%s379 + $0x1c] sm:$0x1] %v404
      %v406 = vld [vmem:[%s379 + $0x20] sm:$0xf]
      %v407 = vsel %vm381, %v337, %v406
      %408 = vst [vmem:[%s379 + $0x20] sm:$0xf] %v407
      %v409 = vld [vmem:[%s379 + $0x24] sm:$0x1]
      %v410 = vsel %vm228, %v338, %v409
      %411 = vst [vmem:[%s379 + $0x24] sm:$0x1] %v410
      %v412 = vld [vmem:[%s379 + $0x28] sm:$0xf]
      %v413 = vsel %vm381, %v345, %v412
      %414 = vst [vmem:[%s379 + $0x28] sm:$0xf] %v413
      %v415 = vld [vmem:[%s379 + $0x2c] sm:$0x1]
      %v416 = vsel %vm228, %v346, %v415
      %417 = vst [vmem:[%s379 + $0x2c] sm:$0x1] %v416
      %v418 = vld [vmem:[%s379 + $0x30] sm:$0xf]
      %v419 = vsel %vm381, %v353, %v418
      %420 = vst [vmem:[%s379 + $0x30] sm:$0xf] %v419
      %v421 = vld [vmem:[%s379 + $0x34] sm:$0x1]
      %v422 = vsel %vm228, %v354, %v421
      %423 = vst [vmem:[%s379 + $0x34] sm:$0x1] %v422
      %v424 = vld [vmem:[%s379 + $0x38] sm:$0xf]
      %v425 = vsel %vm381, %v361, %v424
      %426 = vst [vmem:[%s379 + $0x38] sm:$0xf] %v425
      %v427 = vld [vmem:[%s379 + $0x3c] sm:$0x1]
      %v428 = vsel %vm228, %v362, %v427
      %429 = vst [vmem:[%s379 + $0x3c] sm:$0x1] %v428
      %v430 = vld [vmem:[#allocation2] sm:$0xf]
      %v431 = vld [vmem:[#allocation2 + $0x8] sm:$0xf]
      %v432 = vld [vmem:[#allocation2 + $0x10] sm:$0xf]
      %v433 = vld [vmem:[#allocation2 + $0x18] sm:$0xf]
      %v434 = vld [vmem:[#allocation2 + $0x20] sm:$0xf]
      %v435 = vld [vmem:[#allocation2 + $0x28] sm:$0xf]
      %v436 = vld [vmem:[#allocation2 + $0x30] sm:$0xf]
      %v437 = vld [vmem:[#allocation2 + $0x38] sm:$0xf]
      %438 = vst.msk [vmem:[#allocation3] sm:$0xf] %vm219, %v430
      %439 = vst.msk [vmem:[#allocation3 + $0x4] sm:$0xf] %vm219, %v431
      %440 = vst.msk [vmem:[#allocation3 + $0x8] sm:$0xf] %vm219, %v432
      %441 = vst.msk [vmem:[#allocation3 + $0xc] sm:$0xf] %vm219, %v433
      %442 = vst.msk [vmem:[#allocation3 + $0x10] sm:$0xf] %vm219, %v434
      %443 = vst.msk [vmem:[#allocation3 + $0x14] sm:$0xf] %vm219, %v435
      %444 = vst.msk [vmem:[#allocation3 + $0x18] sm:$0xf] %vm219, %v436
      %445 = vst.msk [vmem:[#allocation3 + $0x1c] sm:$0xf] %vm219, %v437
      %v446 = vld [vmem:[#allocation2] sm:$0xf]
      %v447 = vld [vmem:[#allocation2 + $0x4] sm:$0x1]
      %v448 = vld [vmem:[#allocation2 + $0x8] sm:$0xf]
      %v449 = vld [vmem:[#allocation2 + $0xc] sm:$0x1]
      %v450 = vld [vmem:[#allocation2 + $0x10] sm:$0xf]
      %v451 = vld [vmem:[#allocation2 + $0x14] sm:$0x1]
      %v452 = vld [vmem:[#allocation2 + $0x18] sm:$0xf]
      %v453 = vld [vmem:[#allocation2 + $0x1c] sm:$0x1]
      %v454 = vld [vmem:[#allocation2 + $0x20] sm:$0xf]
      %v455 = vld [vmem:[#allocation2 + $0x24] sm:$0x1]
      %v456 = vld [vmem:[#allocation2 + $0x28] sm:$0xf]
      %v457 = vld [vmem:[#allocation2 + $0x2c] sm:$0x1]
      %v458 = vld [vmem:[#allocation2 + $0x30] sm:$0xf]
      %v459 = vld [vmem:[#allocation2 + $0x34] sm:$0x1]
      %v460 = vld [vmem:[#allocation2 + $0x38] sm:$0xf]
      %v461 = vld [vmem:[#allocation2 + $0x3c] sm:$0x1]
      %vm462 = vsmask.f32 3328
      %vm463 = vsmask.f32 7440
      %vm464 = vmor %vm462, %vm463
      %v466 = vshrl.u32 %v446, 16
      %v468 = vrot.slane %v466, 4
      %v469 = vshll.u32 %v446, 16
      %v471 = vrot.slane %v469, 5
      %v472 = vor.u32 %v468, %v471
      %v473 = vrot.slane %v472, 4
      %v475 = vshll.u32 %v447, 16
      %v477 = vrot.slane %v475, 5
      %v478 = vsel %vm464, %v473, %v477
      %v480 = vshrl.u32 %v448, 16
      %v482 = vrot.slane %v480, 4
      %v483 = vshll.u32 %v448, 16
      %v485 = vrot.slane %v483, 5
      %v486 = vor.u32 %v482, %v485
      %v487 = vrot.slane %v486, 4
      %v489 = vshll.u32 %v449, 16
      %v491 = vrot.slane %v489, 5
      %v492 = vsel %vm464, %v487, %v491
      %v494 = vshrl.u32 %v450, 16
      %v496 = vrot.slane %v494, 4
      %v497 = vshll.u32 %v450, 16
      %v499 = vrot.slane %v497, 5
      %v500 = vor.u32 %v496, %v499
      %v501 = vrot.slane %v500, 4
      %v503 = vshll.u32 %v451, 16
      %v505 = vrot.slane %v503, 5
      %v506 = vsel %vm464, %v501, %v505
      %v508 = vshrl.u32 %v452, 16
      %v510 = vrot.slane %v508, 4
      %v511 = vshll.u32 %v452, 16
      %v513 = vrot.slane %v511, 5
      %v514 = vor.u32 %v510, %v513
      %v515 = vrot.slane %v514, 4
      %v517 = vshll.u32 %v453, 16
      %v519 = vrot.slane %v517, 5
      %v520 = vsel %vm464, %v515, %v519
      %v522 = vshrl.u32 %v454, 16
      %v524 = vrot.slane %v522, 4
      %v525 = vshll.u32 %v454, 16
      %v527 = vrot.slane %v525, 5
      %v528 = vor.u32 %v524, %v527
      %v529 = vrot.slane %v528, 4
      %v531 = vshll.u32 %v455, 16
      %v533 = vrot.slane %v531, 5
      %v534 = vsel %vm464, %v529, %v533
      %v536 = vshrl.u32 %v456, 16
      %v538 = vrot.slane %v536, 4
      %v539 = vshll.u32 %v456, 16
      %v541 = vrot.slane %v539, 5
      %v542 = vor.u32 %v538, %v541
      %v543 = vrot.slane %v542, 4
      %v545 = vshll.u32 %v457, 16
      %v547 = vrot.slane %v545, 5
      %v548 = vsel %vm464, %v543, %v547
      %v550 = vshrl.u32 %v458, 16
      %v552 = vrot.slane %v550, 4
      %v553 = vshll.u32 %v458, 16
      %v555 = vrot.slane %v553, 5
      %v556 = vor.u32 %v552, %v555
      %v557 = vrot.slane %v556, 4
      %v559 = vshll.u32 %v459, 16
      %v561 = vrot.slane %v559, 5
      %v562 = vsel %vm464, %v557, %v561
      %v564 = vshrl.u32 %v460, 16
      %v566 = vrot.slane %v564, 4
      %v567 = vshll.u32 %v460, 16
      %v569 = vrot.slane %v567, 5
      %v570 = vor.u32 %v566, %v569
      %v571 = vrot.slane %v570, 4
      %v573 = vshll.u32 %v461, 16
      %v575 = vrot.slane %v573, 5
      %v576 = vsel %vm464, %v571, %v575
      %577 = vrot.lane.b32.xlu0 %v478, 8
      %v578 = vpop.permute.xlu0 %577
      %579 = vrot.lane.b32.xlu0 %v492, 8
      %v580 = vpop.permute.xlu0 %579
      %581 = vrot.lane.b32.xlu0 %v506, 8
      %v582 = vpop.permute.xlu0 %581
      %583 = vrot.lane.b32.xlu0 %v520, 8
      %v584 = vpop.permute.xlu0 %583
      %585 = vrot.lane.b32.xlu0 %v534, 8
      %v586 = vpop.permute.xlu0 %585
      %587 = vrot.lane.b32.xlu0 %v548, 8
      %v588 = vpop.permute.xlu0 %587
      %589 = vrot.lane.b32.xlu0 %v562, 8
      %v590 = vpop.permute.xlu0 %589
      %591 = vrot.lane.b32.xlu0 %v576, 8
      %v592 = vpop.permute.xlu0 %591
      %vm601 = vcmask 126016
      %602 = vst.msk [vmem:[#allocation3] sm:$0xf] %vm601, %v578
      %603 = vst.msk [vmem:[#allocation3 + $0x4] sm:$0xf] %vm601, %v580
      %604 = vst.msk [vmem:[#allocation3 + $0x8] sm:$0xf] %vm601, %v582
      %605 = vst.msk [vmem:[#allocation3 + $0xc] sm:$0xf] %vm601, %v584
      %606 = vst.msk [vmem:[#allocation3 + $0x10] sm:$0xf] %vm601, %v586
      %607 = vst.msk [vmem:[#allocation3 + $0x14] sm:$0xf] %vm601, %v588
      %608 = vst.msk [vmem:[#allocation3 + $0x18] sm:$0xf] %vm601, %v590
      %609 = vst.msk [vmem:[#allocation3 + $0x1c] sm:$0xf] %vm601, %v592
      %v610 = vld [vmem:[#allocation2] sm:$0xe]
      %v611 = vld [vmem:[#allocation2 + $0x4] sm:$0x1]
      %v612 = vld [vmem:[#allocation2 + $0x8] sm:$0xe]
      %v613 = vld [vmem:[#allocation2 + $0xc] sm:$0x1]
      %v614 = vld [vmem:[#allocation2 + $0x10] sm:$0xe]
      %v615 = vld [vmem:[#allocation2 + $0x14] sm:$0x1]
      %v616 = vld [vmem:[#allocation2 + $0x18] sm:$0xe]
      %v617 = vld [vmem:[#allocation2 + $0x1c] sm:$0x1]
      %v618 = vld [vmem:[#allocation2 + $0x20] sm:$0xe]
      %v619 = vld [vmem:[#allocation2 + $0x24] sm:$0x1]
      %v620 = vld [vmem:[#allocation2 + $0x28] sm:$0xe]
      %v621 = vld [vmem:[#allocation2 + $0x2c] sm:$0x1]
      %v622 = vld [vmem:[#allocation2 + $0x30] sm:$0xe]
      %v623 = vld [vmem:[#allocation2 + $0x34] sm:$0x1]
      %v624 = vld [vmem:[#allocation2 + $0x38] sm:$0xe]
      %v625 = vld [vmem:[#allocation2 + $0x3c] sm:$0x1]
      %vm642 = vcmask 1042432
      %vm643 = vcmask 1046532
      %vm644 = vmor %vm642, %vm643
      %v645 = vrot.slane %v610, 5
      %v646 = vrot.slane %v645, 4
      %v647 = vrot.slane %v611, 5
      %v648 = vsel %vm644, %v646, %v647
      %v649 = vrot.slane %v612, 5
      %v650 = vrot.slane %v649, 4
      %v651 = vrot.slane %v613, 5
      %v652 = vsel %vm644, %v650, %v651
      %v653 = vrot.slane %v614, 5
      %v654 = vrot.slane %v653, 4
      %v655 = vrot.slane %v615, 5
      %v656 = vsel %vm644, %v654, %v655
      %v657 = vrot.slane %v616, 5
      %v658 = vrot.slane %v657, 4
      %v659 = vrot.slane %v617, 5
      %v660 = vsel %vm644, %v658, %v659
      %v661 = vrot.slane %v618, 5
      %v662 = vrot.slane %v661, 4
      %v663 = vrot.slane %v619, 5
      %v664 = vsel %vm644, %v662, %v663
      %v665 = vrot.slane %v620, 5
      %v666 = vrot.slane %v665, 4
      %v667 = vrot.slane %v621, 5
      %v668 = vsel %vm644, %v666, %v667
      %v669 = vrot.slane %v622, 5
      %v670 = vrot.slane %v669, 4
      %v671 = vrot.slane %v623, 5
      %v672 = vsel %vm644, %v670, %v671
      %v673 = vrot.slane %v624, 5
      %v674 = vrot.slane %v673, 4
      %v675 = vrot.slane %v625, 5
      %v676 = vsel %vm644, %v674, %v675
      %677 = vrot.lane.b32.xlu0 %v648, 16
      %v678 = vpop.permute.xlu0 %677
      %679 = vrot.lane.b32.xlu0 %v652, 16
      %v680 = vpop.permute.xlu0 %679
      %681 = vrot.lane.b32.xlu0 %v656, 16
      %v682 = vpop.permute.xlu0 %681
      %683 = vrot.lane.b32.xlu0 %v660, 16
      %v684 = vpop.permute.xlu0 %683
      %685 = vrot.lane.b32.xlu0 %v664, 16
      %v686 = vpop.permute.xlu0 %685
      %687 = vrot.lane.b32.xlu0 %v668, 16
      %v688 = vpop.permute.xlu0 %687
      %689 = vrot.lane.b32.xlu0 %v672, 16
      %v690 = vpop.permute.xlu0 %689
      %691 = vrot.lane.b32.xlu0 %v676, 16
      %v692 = vpop.permute.xlu0 %691
      %vm701 = vcmask 191616
      %702 = vst.msk [vmem:[#allocation3] sm:$0xf] %vm701, %v678
      %703 = vst.msk [vmem:[#allocation3 + $0x4] sm:$0xf] %vm701, %v680
      %704 = vst.msk [vmem:[#allocation3 + $0x8] sm:$0xf] %vm701, %v682
      %705 = vst.msk [vmem:[#allocation3 + $0xc] sm:$0xf] %vm701, %v684
      %706 = vst.msk [vmem:[#allocation3 + $0x10] sm:$0xf] %vm701, %v686
      %707 = vst.msk [vmem:[#allocation3 + $0x14] sm:$0xf] %vm701, %v688
      %708 = vst.msk [vmem:[#allocation3 + $0x18] sm:$0xf] %vm701, %v690
      %709 = vst.msk [vmem:[#allocation3 + $0x1c] sm:$0xf] %vm701, %v692
      %v710 = vld [vmem:[%s379] sm:$0xf]
      %v711 = vld [vmem:[%s379 + $0x8] sm:$0xf]
      %v712 = vld [vmem:[%s379 + $0x10] sm:$0xf]
      %v713 = vld [vmem:[%s379 + $0x18] sm:$0xf]
      %v714 = vld [vmem:[%s379 + $0x20] sm:$0xf]
      %v715 = vld [vmem:[%s379 + $0x28] sm:$0xf]
      %v716 = vld [vmem:[%s379 + $0x30] sm:$0xf]
      %v717 = vld [vmem:[%s379 + $0x38] sm:$0xf]
      %726 = vrot.lane.b32.xlu0 %v710, 24
      %v727 = vpop.permute.xlu0 %726
      %728 = vrot.lane.b32.xlu0 %v711, 24
      %v729 = vpop.permute.xlu0 %728
      %730 = vrot.lane.b32.xlu0 %v712, 24
      %v731 = vpop.permute.xlu0 %730
      %732 = vrot.lane.b32.xlu0 %v713, 24
      %v733 = vpop.permute.xlu0 %732
      %734 = vrot.lane.b32.xlu0 %v714, 24
      %v735 = vpop.permute.xlu0 %734
      %736 = vrot.lane.b32.xlu0 %v715, 24
      %v737 = vpop.permute.xlu0 %736
      %738 = vrot.lane.b32.xlu0 %v716, 24
      %v739 = vpop.permute.xlu0 %738
      %740 = vrot.lane.b32.xlu0 %v717, 24
      %v741 = vpop.permute.xlu0 %740
      %vm750 = vcmask 257216
      %751 = vst.msk [vmem:[#allocation3] sm:$0xf] %vm750, %v727
      %752 = vst.msk [vmem:[#allocation3 + $0x4] sm:$0xf] %vm750, %v729
      %753 = vst.msk [vmem:[#allocation3 + $0x8] sm:$0xf] %vm750, %v731
      %754 = vst.msk [vmem:[#allocation3 + $0xc] sm:$0xf] %vm750, %v733
      %755 = vst.msk [vmem:[#allocation3 + $0x10] sm:$0xf] %vm750, %v735
      %756 = vst.msk [vmem:[#allocation3 + $0x14] sm:$0xf] %vm750, %v737
      %757 = vst.msk [vmem:[#allocation3 + $0x18] sm:$0xf] %vm750, %v739
      %758 = vst.msk [vmem:[#allocation3 + $0x1c] sm:$0xf] %vm750, %v741
      %v759 = vld [vmem:[%s379] sm:$0xf]
      %v760 = vld [vmem:[%s379 + $0x4] sm:$0x1]
      %v761 = vld [vmem:[%s379 + $0x8] sm:$0xf]
      %v762 = vld [vmem:[%s379 + $0xc] sm:$0x1]
      %v763 = vld [vmem:[%s379 + $0x10] sm:$0xf]
      %v764 = vld [vmem:[%s379 + $0x14] sm:$0x1]
      %v765 = vld [vmem:[%s379 + $0x18] sm:$0xf]
      %v766 = vld [vmem:[%s379 + $0x1c] sm:$0x1]
      %v767 = vld [vmem:[%s379 + $0x20] sm:$0xf]
      %v768 = vld [vmem:[%s379 + $0x24] sm:$0x1]
      %v769 = vld [vmem:[%s379 + $0x28] sm:$0xf]
      %v770 = vld [vmem:[%s379 + $0x2c] sm:$0x1]
      %v771 = vld [vmem:[%s379 + $0x30] sm:$0xf]
      %v772 = vld [vmem:[%s379 + $0x34] sm:$0x1]
      %v773 = vld [vmem:[%s379 + $0x38] sm:$0xf]
      %v774 = vld [vmem:[%s379 + $0x3c] sm:$0x1]
      %v776 = vshrl.u32 %v759, 16
      %v778 = vrot.slane %v776, 4
      %v779 = vshll.u32 %v759, 16
      %v781 = vrot.slane %v779, 5
      %v782 = vor.u32 %v778, %v781
      %v783 = vrot.slane %v782, 4
      %v785 = vshll.u32 %v760, 16
      %v787 = vrot.slane %v785, 5
      %v788 = vsel %vm464, %v783, %v787
      %v790 = vshrl.u32 %v761, 16
      %v792 = vrot.slane %v790, 4
      %v793 = vshll.u32 %v761, 16
      %v795 = vrot.slane %v793, 5
      %v796 = vor.u32 %v792, %v795
      %v797 = vrot.slane %v796, 4
      %v799 = vshll.u32 %v762, 16
      %v801 = vrot.slane %v799, 5
      %v802 = vsel %vm464, %v797, %v801
      %v804 = vshrl.u32 %v763, 16
      %v806 = vrot.slane %v804, 4
      %v807 = vshll.u32 %v763, 16
      %v809 = vrot.slane %v807, 5
      %v810 = vor.u32 %v806, %v809
      %v811 = vrot.slane %v810, 4
      %v813 = vshll.u32 %v764, 16
      %v815 = vrot.slane %v813, 5
      %v816 = vsel %vm464, %v811, %v815
      %v818 = vshrl.u32 %v765, 16
      %v820 = vrot.slane %v818, 4
      %v821 = vshll.u32 %v765, 16
      %v823 = vrot.slane %v821, 5
      %v824 = vor.u32 %v820, %v823
      %v825 = vrot.slane %v824, 4
      %v827 = vshll.u32 %v766, 16
      %v829 = vrot.slane %v827, 5
      %v830 = vsel %vm464, %v825, %v829
      %v832 = vshrl.u32 %v767, 16
      %v834 = vrot.slane %v832, 4
      %v835 = vshll.u32 %v767, 16
      %v837 = vrot.slane %v835, 5
      %v838 = vor.u32 %v834, %v837
      %v839 = vrot.slane %v838, 4
      %v841 = vshll.u32 %v768, 16
      %v843 = vrot.slane %v841, 5
      %v844 = vsel %vm464, %v839, %v843
      %v846 = vshrl.u32 %v769, 16
      %v848 = vrot.slane %v846, 4
      %v849 = vshll.u32 %v769, 16
      %v851 = vrot.slane %v849, 5
      %v852 = vor.u32 %v848, %v851
      %v853 = vrot.slane %v852, 4
      %v855 = vshll.u32 %v770, 16
      %v857 = vrot.slane %v855, 5
      %v858 = vsel %vm464, %v853, %v857
      %v860 = vshrl.u32 %v771, 16
      %v862 = vrot.slane %v860, 4
      %v863 = vshll.u32 %v771, 16
      %v865 = vrot.slane %v863, 5
      %v866 = vor.u32 %v862, %v865
      %v867 = vrot.slane %v866, 4
      %v869 = vshll.u32 %v772, 16
      %v871 = vrot.slane %v869, 5
      %v872 = vsel %vm464, %v867, %v871
      %v874 = vshrl.u32 %v773, 16
      %v876 = vrot.slane %v874, 4
      %v877 = vshll.u32 %v773, 16
      %v879 = vrot.slane %v877, 5
      %v880 = vor.u32 %v876, %v879
      %v881 = vrot.slane %v880, 4
      %v883 = vshll.u32 %v774, 16
      %v885 = vrot.slane %v883, 5
      %v886 = vsel %vm464, %v881, %v885
      %887 = vrot.lane.b32.xlu0 %v788, 32
      %v888 = vpop.permute.xlu0 %887
      %889 = vrot.lane.b32.xlu0 %v802, 32
      %v890 = vpop.permute.xlu0 %889
      %891 = vrot.lane.b32.xlu0 %v816, 32
      %v892 = vpop.permute.xlu0 %891
      %893 = vrot.lane.b32.xlu0 %v830, 32
      %v894 = vpop.permute.xlu0 %893
      %895 = vrot.lane.b32.xlu0 %v844, 32
      %v896 = vpop.permute.xlu0 %895
      %897 = vrot.lane.b32.xlu0 %v858, 32
      %v898 = vpop.permute.xlu0 %897
      %899 = vrot.lane.b32.xlu0 %v872, 32
      %v900 = vpop.permute.xlu0 %899
      %901 = vrot.lane.b32.xlu0 %v886, 32
      %v902 = vpop.permute.xlu0 %901
      %vm911 = vcmask 322816
      %912 = vst.msk [vmem:[#allocation3] sm:$0xf] %vm911, %v888
      %913 = vst.msk [vmem:[#allocation3 + $0x4] sm:$0xf] %vm911, %v890
      %914 = vst.msk [vmem:[#allocation3 + $0x8] sm:$0xf] %vm911, %v892
      %915 = vst.msk [vmem:[#allocation3 + $0xc] sm:$0xf] %vm911, %v894
      %916 = vst.msk [vmem:[#allocation3 + $0x10] sm:$0xf] %vm911, %v896
      %917 = vst.msk [vmem:[#allocation3 + $0x14] sm:$0xf] %vm911, %v898
      %918 = vst.msk [vmem:[#allocation3 + $0x18] sm:$0xf] %vm911, %v900
      %919 = vst.msk [vmem:[#allocation3 + $0x1c] sm:$0xf] %vm911, %v902
      %v920 = vld [vmem:[%s379] sm:$0xe]
      %v921 = vld [vmem:[%s379 + $0x4] sm:$0x1]
      %v922 = vld [vmem:[%s379 + $0x8] sm:$0xe]
      %v923 = vld [vmem:[%s379 + $0xc] sm:$0x1]
      %v924 = vld [vmem:[%s379 + $0x10] sm:$0xe]
      %v925 = vld [vmem:[%s379 + $0x14] sm:$0x1]
      %v926 = vld [vmem:[%s379 + $0x18] sm:$0xe]
      %v927 = vld [vmem:[%s379 + $0x1c] sm:$0x1]
      %v928 = vld [vmem:[%s379 + $0x20] sm:$0xe]
      %v929 = vld [vmem:[%s379 + $0x24] sm:$0x1]
      %v930 = vld [vmem:[%s379 + $0x28] sm:$0xe]
      %v931 = vld [vmem:[%s379 + $0x2c] sm:$0x1]
      %v932 = vld [vmem:[%s379 + $0x30] sm:$0xe]
      %v933 = vld [vmem:[%s379 + $0x34] sm:$0x1]
      %v934 = vld [vmem:[%s379 + $0x38] sm:$0xe]
      %v935 = vld [vmem:[%s379 + $0x3c] sm:$0x1]
      %v952 = vrot.slane %v920, 5
      %v953 = vrot.slane %v952, 4
      %v954 = vrot.slane %v921, 5
      %v955 = vsel %vm644, %v953, %v954
      %v956 = vrot.slane %v922, 5
      %v957 = vrot.slane %v956, 4
      %v958 = vrot.slane %v923, 5
      %v959 = vsel %vm644, %v957, %v958
      %v960 = vrot.slane %v924, 5
      %v961 = vrot.slane %v960, 4
      %v962 = vrot.slane %v925, 5
      %v963 = vsel %vm644, %v961, %v962
      %v964 = vrot.slane %v926, 5
      %v965 = vrot.slane %v964, 4
      %v966 = vrot.slane %v927, 5
      %v967 = vsel %vm644, %v965, %v966
      %v968 = vrot.slane %v928, 5
      %v969 = vrot.slane %v968, 4
      %v970 = vrot.slane %v929, 5
      %v971 = vsel %vm644, %v969, %v970
      %v972 = vrot.slane %v930, 5
      %v973 = vrot.slane %v972, 4
      %v974 = vrot.slane %v931, 5
      %v975 = vsel %vm644, %v973, %v974
      %v976 = vrot.slane %v932, 5
      %v977 = vrot.slane %v976, 4
      %v978 = vrot.slane %v933, 5
      %v979 = vsel %vm644, %v977, %v978
      %v980 = vrot.slane %v934, 5
      %v981 = vrot.slane %v980, 4
      %v982 = vrot.slane %v935, 5
      %v983 = vsel %vm644, %v981, %v982
      %984 = vrot.lane.b32.xlu0 %v955, 40
      %v985 = vpop.permute.xlu0 %984
      %986 = vrot.lane.b32.xlu0 %v959, 40
      %v987 = vpop.permute.xlu0 %986
      %988 = vrot.lane.b32.xlu0 %v963, 40
      %v989 = vpop.permute.xlu0 %988
      %990 = vrot.lane.b32.xlu0 %v967, 40
      %v991 = vpop.permute.xlu0 %990
      %992 = vrot.lane.b32.xlu0 %v971, 40
      %v993 = vpop.permute.xlu0 %992
      %994 = vrot.lane.b32.xlu0 %v975, 40
      %v995 = vpop.permute.xlu0 %994
      %996 = vrot.lane.b32.xlu0 %v979, 40
      %v997 = vpop.permute.xlu0 %996
      %998 = vrot.lane.b32.xlu0 %v983, 40
      %v999 = vpop.permute.xlu0 %998
      %vm1008 = vcmask 388416
      %1009 = vst.msk [vmem:[#allocation3] sm:$0xf] %vm1008, %v985
      %1010 = vst.msk [vmem:[#allocation3 + $0x4] sm:$0xf] %vm1008, %v987
      %1011 = vst.msk [vmem:[#allocation3 + $0x8] sm:$0xf] %vm1008, %v989
      %1012 = vst.msk [vmem:[#allocation3 + $0xc] sm:$0xf] %vm1008, %v991
      %1013 = vst.msk [vmem:[#allocation3 + $0x10] sm:$0xf] %vm1008, %v993
      %1014 = vst.msk [vmem:[#allocation3 + $0x14] sm:$0xf] %vm1008, %v995
      %1015 = vst.msk [vmem:[#allocation3 + $0x18] sm:$0xf] %vm1008, %v997
      %1016 = vst.msk [vmem:[#allocation3 + $0x1c] sm:$0xf] %vm1008, %v999
      %s1017 = scalar_lea.vmem [#allocation2], 16
      %v1018 = vld [vmem:[%s1017] sm:$0xf]
      %v1019 = vld [vmem:[%s1017 + $0x8] sm:$0xf]
      %v1020 = vld [vmem:[%s1017 + $0x10] sm:$0xf]
      %v1021 = vld [vmem:[%s1017 + $0x18] sm:$0xf]
      %v1022 = vld [vmem:[%s1017 + $0x20] sm:$0xf]
      %v1023 = vld [vmem:[%s1017 + $0x28] sm:$0xf]
      %v1024 = vld [vmem:[%s1017 + $0x30] sm:$0xf]
      %v1025 = vld [vmem:[%s1017 + $0x38] sm:$0xf]
      %1034 = vrot.lane.b32.xlu0 %v1018, 48
      %v1035 = vpop.permute.xlu0 %1034
      %1036 = vrot.lane.b32.xlu0 %v1019, 48
      %v1037 = vpop.permute.xlu0 %1036
      %1038 = vrot.lane.b32.xlu0 %v1020, 48
      %v1039 = vpop.permute.xlu0 %1038
      %1040 = vrot.lane.b32.xlu0 %v1021, 48
      %v1041 = vpop.permute.xlu0 %1040
      %1042 = vrot.lane.b32.xlu0 %v1022, 48
      %v1043 = vpop.permute.xlu0 %1042
      %1044 = vrot.lane.b32.xlu0 %v1023, 48
      %v1045 = vpop.permute.xlu0 %1044
      %1046 = vrot.lane.b32.xlu0 %v1024, 48
      %v1047 = vpop.permute.xlu0 %1046
      %1048 = vrot.lane.b32.xlu0 %v1025, 48
      %v1049 = vpop.permute.xlu0 %1048
      %vm1058 = vcmask 454016
      %1059 = vst.msk [vmem:[#allocation3] sm:$0xf] %vm1058, %v1035
      %1060 = vst.msk [vmem:[#allocation3 + $0x4] sm:$0xf] %vm1058, %v1037
      %1061 = vst.msk [vmem:[#allocation3 + $0x8] sm:$0xf] %vm1058, %v1039
      %1062 = vst.msk [vmem:[#allocation3 + $0xc] sm:$0xf] %vm1058, %v1041
      %1063 = vst.msk [vmem:[#allocation3 + $0x10] sm:$0xf] %vm1058, %v1043
      %1064 = vst.msk [vmem:[#allocation3 + $0x14] sm:$0xf] %vm1058, %v1045
      %1065 = vst.msk [vmem:[#allocation3 + $0x18] sm:$0xf] %vm1058, %v1047
      %1066 = vst.msk [vmem:[#allocation3 + $0x1c] sm:$0xf] %vm1058, %v1049
      %v1067 = vld [vmem:[%s1017] sm:$0xf]
      %v1068 = vld [vmem:[%s1017 + $0x4] sm:$0x1]
      %v1069 = vld [vmem:[%s1017 + $0x8] sm:$0xf]
      %v1070 = vld [vmem:[%s1017 + $0xc] sm:$0x1]
      %v1071 = vld [vmem:[%s1017 + $0x10] sm:$0xf]
      %v1072 = vld [vmem:[%s1017 + $0x14] sm:$0x1]
      %v1073 = vld [vmem:[%s1017 + $0x18] sm:$0xf]
      %v1074 = vld [vmem:[%s1017 + $0x1c] sm:$0x1]
      %v1075 = vld [vmem:[%s1017 + $0x20] sm:$0xf]
      %v1076 = vld [vmem:[%s1017 + $0x24] sm:$0x1]
      %v1077 = vld [vmem:[%s1017 + $0x28] sm:$0xf]
      %v1078 = vld [vmem:[%s1017 + $0x2c] sm:$0x1]
      %v1079 = vld [vmem:[%s1017 + $0x30] sm:$0xf]
      %v1080 = vld [vmem:[%s1017 + $0x34] sm:$0x1]
      %v1081 = vld [vmem:[%s1017 + $0x38] sm:$0xf]
      %v1082 = vld [vmem:[%s1017 + $0x3c] sm:$0x1]
      %v1084 = vshrl.u32 %v1067, 16
      %v1086 = vrot.slane %v1084, 4
      %v1087 = vshll.u32 %v1067, 16
      %v1089 = vrot.slane %v1087, 5
      %v1090 = vor.u32 %v1086, %v1089
      %v1091 = vrot.slane %v1090, 4
      %v1093 = vshll.u32 %v1068, 16
      %v1095 = vrot.slane %v1093, 5
      %v1096 = vsel %vm464, %v1091, %v1095
      %v1098 = vshrl.u32 %v1069, 16
      %v1100 = vrot.slane %v1098, 4
      %v1101 = vshll.u32 %v1069, 16
      %v1103 = vrot.slane %v1101, 5
      %v1104 = vor.u32 %v1100, %v1103
      %v1105 = vrot.slane %v1104, 4
      %v1107 = vshll.u32 %v1070, 16
      %v1109 = vrot.slane %v1107, 5
      %v1110 = vsel %vm464, %v1105, %v1109
      %v1112 = vshrl.u32 %v1071, 16
      %v1114 = vrot.slane %v1112, 4
      %v1115 = vshll.u32 %v1071, 16
      %v1117 = vrot.slane %v1115, 5
      %v1118 = vor.u32 %v1114, %v1117
      %v1119 = vrot.slane %v1118, 4
      %v1121 = vshll.u32 %v1072, 16
      %v1123 = vrot.slane %v1121, 5
      %v1124 = vsel %vm464, %v1119, %v1123
      %v1126 = vshrl.u32 %v1073, 16
      %v1128 = vrot.slane %v1126, 4
      %v1129 = vshll.u32 %v1073, 16
      %v1131 = vrot.slane %v1129, 5
      %v1132 = vor.u32 %v1128, %v1131
      %v1133 = vrot.slane %v1132, 4
      %v1135 = vshll.u32 %v1074, 16
      %v1137 = vrot.slane %v1135, 5
      %v1138 = vsel %vm464, %v1133, %v1137
      %v1140 = vshrl.u32 %v1075, 16
      %v1142 = vrot.slane %v1140, 4
      %v1143 = vshll.u32 %v1075, 16
      %v1145 = vrot.slane %v1143, 5
      %v1146 = vor.u32 %v1142, %v1145
      %v1147 = vrot.slane %v1146, 4
      %v1149 = vshll.u32 %v1076, 16
      %v1151 = vrot.slane %v1149, 5
      %v1152 = vsel %vm464, %v1147, %v1151
      %v1154 = vshrl.u32 %v1077, 16
      %v1156 = vrot.slane %v1154, 4
      %v1157 = vshll.u32 %v1077, 16
      %v1159 = vrot.slane %v1157, 5
      %v1160 = vor.u32 %v1156, %v1159
      %v1161 = vrot.slane %v1160, 4
      %v1163 = vshll.u32 %v1078, 16
      %v1165 = vrot.slane %v1163, 5
      %v1166 = vsel %vm464, %v1161, %v1165
      %v1168 = vshrl.u32 %v1079, 16
      %v1170 = vrot.slane %v1168, 4
      %v1171 = vshll.u32 %v1079, 16
      %v1173 = vrot.slane %v1171, 5
      %v1174 = vor.u32 %v1170, %v1173
      %v1175 = vrot.slane %v1174, 4
      %v1177 = vshll.u32 %v1080, 16
      %v1179 = vrot.slane %v1177, 5
      %v1180 = vsel %vm464, %v1175, %v1179
      %v1182 = vshrl.u32 %v1081, 16
      %v1184 = vrot.slane %v1182, 4
      %v1185 = vshll.u32 %v1081, 16
      %v1187 = vrot.slane %v1185, 5
      %v1188 = vor.u32 %v1184, %v1187
      %v1189 = vrot.slane %v1188, 4
      %v1191 = vshll.u32 %v1082, 16
      %v1193 = vrot.slane %v1191, 5
      %v1194 = vsel %vm464, %v1189, %v1193
      %1195 = vrot.lane.b32.xlu0 %v1096, 56
      %v1196 = vpop.permute.xlu0 %1195
      %1197 = vrot.lane.b32.xlu0 %v1110, 56
      %v1198 = vpop.permute.xlu0 %1197
      %1199 = vrot.lane.b32.xlu0 %v1124, 56
      %v1200 = vpop.permute.xlu0 %1199
      %1201 = vrot.lane.b32.xlu0 %v1138, 56
      %v1202 = vpop.permute.xlu0 %1201
      %1203 = vrot.lane.b32.xlu0 %v1152, 56
      %v1204 = vpop.permute.xlu0 %1203
      %1205 = vrot.lane.b32.xlu0 %v1166, 56
      %v1206 = vpop.permute.xlu0 %1205
      %1207 = vrot.lane.b32.xlu0 %v1180, 56
      %v1208 = vpop.permute.xlu0 %1207
      %1209 = vrot.lane.b32.xlu0 %v1194, 56
      %v1210 = vpop.permute.xlu0 %1209
      %vm1219 = vcmask 519616
      %1220 = vst.msk [vmem:[#allocation3] sm:$0xf] %vm1219, %v1196
      %1221 = vst.msk [vmem:[#allocation3 + $0x4] sm:$0xf] %vm1219, %v1198
      %1222 = vst.msk [vmem:[#allocation3 + $0x8] sm:$0xf] %vm1219, %v1200
      %1223 = vst.msk [vmem:[#allocation3 + $0xc] sm:$0xf] %vm1219, %v1202
      %1224 = vst.msk [vmem:[#allocation3 + $0x10] sm:$0xf] %vm1219, %v1204
      %1225 = vst.msk [vmem:[#allocation3 + $0x14] sm:$0xf] %vm1219, %v1206
      %1226 = vst.msk [vmem:[#allocation3 + $0x18] sm:$0xf] %vm1219, %v1208
      %1227 = vst.msk [vmem:[#allocation3 + $0x1c] sm:$0xf] %vm1219, %v1210
      %v1228 = vld [vmem:[%s1017] sm:$0xe]
      %v1229 = vld [vmem:[%s1017 + $0x4] sm:$0x1]
      %v1230 = vld [vmem:[%s1017 + $0x8] sm:$0xe]
      %v1231 = vld [vmem:[%s1017 + $0xc] sm:$0x1]
      %v1232 = vld [vmem:[%s1017 + $0x10] sm:$0xe]
      %v1233 = vld [vmem:[%s1017 + $0x14] sm:$0x1]
      %v1234 = vld [vmem:[%s1017 + $0x18] sm:$0xe]
      %v1235 = vld [vmem:[%s1017 + $0x1c] sm:$0x1]
      %v1236 = vld [vmem:[%s1017 + $0x20] sm:$0xe]
      %v1237 = vld [vmem:[%s1017 + $0x24] sm:$0x1]
      %v1238 = vld [vmem:[%s1017 + $0x28] sm:$0xe]
      %v1239 = vld [vmem:[%s1017 + $0x2c] sm:$0x1]
      %v1240 = vld [vmem:[%s1017 + $0x30] sm:$0xe]
      %v1241 = vld [vmem:[%s1017 + $0x34] sm:$0x1]
      %v1242 = vld [vmem:[%s1017 + $0x38] sm:$0xe]
      %v1243 = vld [vmem:[%s1017 + $0x3c] sm:$0x1]
      %v1260 = vrot.slane %v1228, 5
      %v1261 = vrot.slane %v1260, 4
      %v1262 = vrot.slane %v1229, 5
      %v1263 = vsel %vm644, %v1261, %v1262
      %v1264 = vrot.slane %v1230, 5
      %v1265 = vrot.slane %v1264, 4
      %v1266 = vrot.slane %v1231, 5
      %v1267 = vsel %vm644, %v1265, %v1266
      %v1268 = vrot.slane %v1232, 5
      %v1269 = vrot.slane %v1268, 4
      %v1270 = vrot.slane %v1233, 5
      %v1271 = vsel %vm644, %v1269, %v1270
      %v1272 = vrot.slane %v1234, 5
      %v1273 = vrot.slane %v1272, 4
      %v1274 = vrot.slane %v1235, 5
      %v1275 = vsel %vm644, %v1273, %v1274
      %v1276 = vrot.slane %v1236, 5
      %v1277 = vrot.slane %v1276, 4
      %v1278 = vrot.slane %v1237, 5
      %v1279 = vsel %vm644, %v1277, %v1278
      %v1280 = vrot.slane %v1238, 5
      %v1281 = vrot.slane %v1280, 4
      %v1282 = vrot.slane %v1239, 5
      %v1283 = vsel %vm644, %v1281, %v1282
      %v1284 = vrot.slane %v1240, 5
      %v1285 = vrot.slane %v1284, 4
      %v1286 = vrot.slane %v1241, 5
      %v1287 = vsel %vm644, %v1285, %v1286
      %v1288 = vrot.slane %v1242, 5
      %v1289 = vrot.slane %v1288, 4
      %v1290 = vrot.slane %v1243, 5
      %v1291 = vsel %vm644, %v1289, %v1290
      %1292 = vrot.lane.b32.xlu0 %v1263, 64
      %v1293 = vpop.permute.xlu0 %1292
      %1294 = vrot.lane.b32.xlu0 %v1267, 64
      %v1295 = vpop.permute.xlu0 %1294
      %1296 = vrot.lane.b32.xlu0 %v1271, 64
      %v1297 = vpop.permute.xlu0 %1296
      %1298 = vrot.lane.b32.xlu0 %v1275, 64
      %v1299 = vpop.permute.xlu0 %1298
      %1300 = vrot.lane.b32.xlu0 %v1279, 64
      %v1301 = vpop.permute.xlu0 %1300
      %1302 = vrot.lane.b32.xlu0 %v1283, 64
      %v1303 = vpop.permute.xlu0 %1302
      %1304 = vrot.lane.b32.xlu0 %v1287, 64
      %v1305 = vpop.permute.xlu0 %1304
      %1306 = vrot.lane.b32.xlu0 %v1291, 64
      %v1307 = vpop.permute.xlu0 %1306
      %vm1316 = vcmask 585216
      %1317 = vst.msk [vmem:[#allocation3] sm:$0xf] %vm1316, %v1293
      %1318 = vst.msk [vmem:[#allocation3 + $0x4] sm:$0xf] %vm1316, %v1295
      %1319 = vst.msk [vmem:[#allocation3 + $0x8] sm:$0xf] %vm1316, %v1297
      %1320 = vst.msk [vmem:[#allocation3 + $0xc] sm:$0xf] %vm1316, %v1299
      %1321 = vst.msk [vmem:[#allocation3 + $0x10] sm:$0xf] %vm1316, %v1301
      %1322 = vst.msk [vmem:[#allocation3 + $0x14] sm:$0xf] %vm1316, %v1303
      %1323 = vst.msk [vmem:[#allocation3 + $0x18] sm:$0xf] %vm1316, %v1305
      %1324 = vst.msk [vmem:[#allocation3 + $0x1c] sm:$0xf] %vm1316, %v1307
      %v1325 = vld [vmem:[%s212] sm:$0xf]
      %v1326 = vld [vmem:[%s212 + $0x4] sm:$0xf]
      %v1327 = vld [vmem:[%s212 + $0x8] sm:$0xf]
      %v1328 = vld [vmem:[%s212 + $0xc] sm:$0xf]
      %v1329 = vld [vmem:[%s212 + $0x10] sm:$0xf]
      %v1330 = vld [vmem:[%s212 + $0x14] sm:$0xf]
      %v1331 = vld [vmem:[%s212 + $0x18] sm:$0xf]
      %v1332 = vld [vmem:[%s212 + $0x1c] sm:$0xf]
      %1341 = vrot.lane.b32.xlu0 %v1325, 72
      %v1342 = vpop.permute.xlu0 %1341
      %1343 = vrot.lane.b32.xlu0 %v1326, 72
      %v1344 = vpop.permute.xlu0 %1343
      %1345 = vrot.lane.b32.xlu0 %v1327, 72
      %v1346 = vpop.permute.xlu0 %1345
      %1347 = vrot.lane.b32.xlu0 %v1328, 72
      %v1348 = vpop.permute.xlu0 %1347
      %1349 = vrot.lane.b32.xlu0 %v1329, 72
      %v1350 = vpop.permute.xlu0 %1349
      %1351 = vrot.lane.b32.xlu0 %v1330, 72
      %v1352 = vpop.permute.xlu0 %1351
      %1353 = vrot.lane.b32.xlu0 %v1331, 72
      %v1354 = vpop.permute.xlu0 %1353
      %1355 = vrot.lane.b32.xlu0 %v1332, 72
      %v1356 = vpop.permute.xlu0 %1355
      %vm1365 = vcmask 618048
      %1366 = vst.msk [vmem:[#allocation3] sm:$0xf] %vm1365, %v1342
      %1367 = vst.msk [vmem:[#allocation3 + $0x4] sm:$0xf] %vm1365, %v1344
      %1368 = vst.msk [vmem:[#allocation3 + $0x8] sm:$0xf] %vm1365, %v1346
      %1369 = vst.msk [vmem:[#allocation3 + $0xc] sm:$0xf] %vm1365, %v1348
      %1370 = vst.msk [vmem:[#allocation3 + $0x10] sm:$0xf] %vm1365, %v1350
      %1371 = vst.msk [vmem:[#allocation3 + $0x14] sm:$0xf] %vm1365, %v1352
      %1372 = vst.msk [vmem:[#allocation3 + $0x18] sm:$0xf] %vm1365, %v1354
      %1373 = vst.msk [vmem:[#allocation3 + $0x1c] sm:$0xf] %vm1365, %v1356
      %v1374 = vld [vmem:[#allocation3] sm:$0xf]
      %v1375 = vld [vmem:[#allocation3 + $0x4] sm:$0xf]
      %v1376 = vld [vmem:[#allocation3 + $0x8] sm:$0xf]
      %v1377 = vld [vmem:[#allocation3 + $0xc] sm:$0xf]
      %v1378 = vld [vmem:[#allocation3 + $0x10] sm:$0xf]
      %v1379 = vld [vmem:[#allocation3 + $0x14] sm:$0xf]
      %v1380 = vld [vmem:[#allocation3 + $0x18] sm:$0xf]
      %v1381 = vld [vmem:[#allocation3 + $0x1c] sm:$0xf]
      %v1382 = vld [vmem:[%s2] sm:$0xf]
      %v1383 = vld [vmem:[%s2 + $0x4] sm:$0xf]
      %v1384 = vld [vmem:[%s2 + $0x8] sm:$0xf]
      %v1385 = vld [vmem:[%s2 + $0xc] sm:$0xf]
      %v1386 = vld [vmem:[%s2 + $0x10] sm:$0xf]
      %v1387 = vld [vmem:[%s2 + $0x14] sm:$0xf]
      %v1388 = vld [vmem:[%s2 + $0x18] sm:$0xf]
      %v1389 = vld [vmem:[%s2 + $0x1c] sm:$0xf]
      %v1390 = vld [vmem:[%s2 + $0x20] sm:$0xf]
      %v1391 = vld [vmem:[%s2 + $0x24] sm:$0x3]
      %v1392 = vld [vmem:[%s3] sm:$0x1]
      %v1394 = vlaneseq
      %v1395 = vshrl.u32 %v1394, 7
      %v1396 = vsub.s32 0, %v1395
      %v1397 = vrot.slane %v1392, %v1396
      %v1407 = vunpack.c.l.b16 %v1374
      %v1408 = vunpack.c.l.b16 %v1375
      %v1409 = vunpack.c.l.b16 %v1376
      %v1410 = vunpack.c.l.b16 %v1377
      %v1411 = vunpack.c.l.b16 %v1378
      %v1412 = vunpack.c.l.b16 %v1379
      %v1413 = vunpack.c.l.b16 %v1380
      %v1414 = vunpack.c.l.b16 %v1381
      %v1415 = vpack.c.b16 %v1408, %v1407
      %v1416 = vpack.c.b16 %v1410, %v1409
      %v1417 = vpack.c.b16 %v1412, %v1411
      %v1418 = vpack.c.b16 %v1414, %v1413
      %v1429 = vunpack.c.l.b16 %v1382
      %v1430 = vunpack.c.l.b16 %v1383
      %v1431 = vunpack.c.l.b16 %v1384
      %v1432 = vunpack.c.l.b16 %v1385
      %v1433 = vunpack.c.l.b16 %v1386
      %v1434 = vunpack.c.l.b16 %v1387
      %v1435 = vunpack.c.l.b16 %v1388
      %v1436 = vunpack.c.l.b16 %v1389
      %v1437 = vunpack.c.l.b16 %v1390
      %v1438 = vunpack.c.l.b16 %v1391
      %v1439 = vpack.c.b16 %v1430, %v1429
      %v1440 = vpack.c.b16 %v1432, %v1431
      %v1441 = vpack.c.b16 %v1434, %v1433
      %v1442 = vpack.c.b16 %v1436, %v1435
      %v1443 = vpack.c.b16 %v1438, %v1437
      %vm1448 = vcmask 621568
      %v1450 = vsel %vm1448, %v1415, 0
      %v1453 = vsel %vm1448, %v1416, 0
      %v1456 = vsel %vm1448, %v1417, 0
      %v1459 = vsel %vm1448, %v1418, 0
      %vm1461 = vcmask 1045504
      %v1463 = vsel %vm1461, %v1443, 0
      %1465 = vmatprep.subr.bf16.mxu0 0
      %1466 = vmatpush1.bf16.msra.mxu0 %v1439
      %1467 = vmatprep.subr.bf16.mxu0 0
      %1468 = vmatpush1.bf16.msra.mxu0 %v1440
      %1469 = vmatprep.subr.bf16.mxu0 0
      %1470 = vmatpush1.bf16.msra.mxu0 %v1441
      %1471 = vmatprep.subr.bf16.mxu0 0
      %1472 = vmatpush1.bf16.msra.mxu0 %v1442
      %1473 = vmatprep.subr.bf16.mxu0 0
      %1474 = vmatpush1.bf16.msra.mxu0 %v1463
      %1475 = vmatprep.subr.bf16.mxu0 0
      %1476 = vmatpush1.bf16.msra.mxu0 0
      %1477 = vmatprep.subr.bf16.mxu0 0
      %1478 = vmatpush1.bf16.msra.mxu0 0
      %1479 = vmatprep.subr.bf16.mxu0 0
      %1480 = vmatpush1.bf16.msra.mxu0 0
      %1481 = vmatprep.subr.bf16.mxu0 0
      %1482 = vmatpush1.bf16.msra.mxu0 0
      %1483 = vmatprep.subr.bf16.mxu0 0
      %1484 = vmatpush1.bf16.msra.mxu0 0
      %1485 = vmatprep.subr.bf16.mxu0 0
      %1486 = vmatpush1.bf16.msra.mxu0 0
      %1487 = vmatprep.subr.bf16.mxu0 0
      %1488 = vmatpush1.bf16.msra.mxu0 0
      %1489 = vmatprep.subr.bf16.mxu0 0
      %1490 = vmatpush1.bf16.msra.mxu0 0
      %1491 = vmatprep.subr.bf16.mxu0 0
      %1492 = vmatpush1.bf16.msra.mxu0 0
      %1493 = vmatprep.subr.bf16.mxu0 0
      %1494 = vmatpush1.bf16.msra.mxu0 0
      %1495 = vmatprep.subr.bf16.mxu0 0
      %1496 = vmatpush1.bf16.msra.mxu0 0
      %1497 = vmatprep.mubr.bf16.mxu0 0
      %1498 = vmatmul.mubr.bf16.gmra.mrb[0].mxu0 %v1450
      %v1499 = vpop.f32.mrb[0].mxu0
      %v1500 = vadd.f32 %v1397, %v1499
      %v1501 = vpop.f32.mrb[0].mxu0
      %v1502 = vpop.f32.mrb[0].mxu0
      %v1503 = vadd.f32 %v1397, %v1502
      %v1504 = vpop.f32.mrb[0].mxu0
      %1505 = vmatprep.mubr.bf16.mxu0 0
      %1506 = vmatmul.mubr.bf16.gmra.mrb[0].mxu0 %v1453
      %v1507 = vpop.f32.mrb[0].mxu0
      %v1508 = vadd.f32 %v1397, %v1507
      %v1509 = vpop.f32.mrb[0].mxu0
      %v1510 = vpop.f32.mrb[0].mxu0
      %v1511 = vadd.f32 %v1397, %v1510
      %v1512 = vpop.f32.mrb[0].mxu0
      %1513 = vmatprep.mubr.bf16.mxu0 0
      %1514 = vmatmul.mubr.bf16.gmra.mrb[0].mxu0 %v1456
      %v1515 = vpop.f32.mrb[0].mxu0
      %v1516 = vadd.f32 %v1397, %v1515
      %v1517 = vpop.f32.mrb[0].mxu0
      %v1518 = vpop.f32.mrb[0].mxu0
      %v1519 = vadd.f32 %v1397, %v1518
      %v1520 = vpop.f32.mrb[0].mxu0
      %1521 = vmatprep.mubr.bf16.mxu0 0
      %1522 = vmatmul.mubr.bf16.gmra.mrb[0].mxu0 %v1459
      %v1523 = vpop.f32.mrb[0].mxu0
      %v1524 = vadd.f32 %v1397, %v1523
      %v1525 = vpop.f32.mrb[0].mxu0
      %v1526 = vpop.f32.mrb[0].mxu0
      %v1527 = vadd.f32 %v1397, %v1526
      %v1528 = vpop.f32.mrb[0].mxu0
      %1529 = vdwg.mxu0
      %v1530 = vmax.f32 %v1500, 0.0
      %v1531 = vmax.f32 %v1503, 0.0
      %v1532 = vmax.f32 %v1508, 0.0
      %v1533 = vmax.f32 %v1511, 0.0
      %v1534 = vmax.f32 %v1516, 0.0
      %v1535 = vmax.f32 %v1519, 0.0
      %v1536 = vmax.f32 %v1524, 0.0
      %v1537 = vmax.f32 %v1527, 0.0
      %vm1538 = vcmask 64512
      %1539 = vst.msk [vmem:[%s217] sm:$0xff] %vm1538, %v1530
      %1540 = vst.msk [vmem:[%s217 + $0x8] sm:$0xff] %vm1538, %v1531
      %1541 = vst.msk [vmem:[%s217 + $0x10] sm:$0xff] %vm1538, %v1532
      %1542 = vst.msk [vmem:[%s217 + $0x18] sm:$0xff] %vm1538, %v1533
      %1543 = vst.msk [vmem:[%s217 + $0x20] sm:$0xff] %vm1538, %v1534
      %1544 = vst.msk [vmem:[%s217 + $0x28] sm:$0xff] %vm1538, %v1535
      %1545 = vst.msk [vmem:[%s217 + $0x30] sm:$0xff] %vm1538, %v1536
      %1546 = vst.msk [vmem:[%s217 + $0x38] sm:$0xff] %vm1538, %v1537
      %p1547 = scmp.lt.s32.totalorder %s15, 1
      %s1548 = scalar_select %p1547, %s15, 1
      %s1549 = smul.addr %s1548, 8
      %s1550 = smul.addr %s1549, 8
      %s1551 = scalar_lea.vmem %s4, %s1550
      // Predicated region
      $region37: #{basic_block_forward.3} parent=35 // pred_check
        %p1552 = pneg %p127
      $region38: #{basic_block_forward.3} parent=35 // pred_check_branch
        %1554 = sbr.rel (%p1552) target = $region40
      $region39: #{basic_block_forward.3} parent=35 // pred_region
        _
      $region40: #{basic_block_forward.3} parent=35 // pred_fallthru
        _
    $region36: #{basic_block_forward.3} parent=5 // pred_fallthru
      _
    %p1555 = scmp.le.s32.totalorder 2, %s10
    // Predicated region
    $region41: #{basic_block_forward.3} parent=5 // pred_check
      %p1556 = pneg %p1555
    $region42: #{basic_block_forward.3} parent=5 // pred_check_branch
      %1558 = sbr.rel (%p1556) target = $region44
    $region43: #{basic_block_forward.3} parent=5 // pred_region
      %s1559 = ssub.s32 %s10, 2
      // Predicated region
      $region45: #{basic_block_forward.3} parent=43 // pred_check
        %p1560 = pneg %p133
      $region46: #{basic_block_forward.3} parent=43 // pred_check_branch
        %1562 = sbr.rel (%p1560) target = $region48
      $region47: #{basic_block_forward.3} parent=43 // pred_region
        %p1563 = scmp.lt.s32.totalorder %s16, 1
        %s1564 = scalar_select %p1563, %s16, 1
        %s1565 = smul.addr %s1564, 8
        %s1566 = smul.addr %s1565, 8
        %s1567 = scalar_lea.vmem %s4, %s1566
      $region48: #{basic_block_forward.3} parent=43 // pred_fallthru
        _
    $region44: #{basic_block_forward.3} parent=5 // pred_fallthru
      _
  $region6: #{basic_block_forward.3} parent=0 // loop_footer
    %s14 = sadd.s32 1, %s10
  $region7: #{basic_block_forward.3} parent=0 // loop_footer_branch
    %9 = sbr.rel target = $region3
  $region8: #{basic_block_forward.3} parent=0 // loop_exit
    _

</llo_original>
